<compile_context>
chip_gen: v6e
topology: v6e:2x2x1
jax: 0.10.0
libtpu: 0.0.40
codegen_flags: <defaults>
</compile_context>

<pallas_src>
import functools

import jax
import jax.numpy as jnp
from jax.experimental import pallas as pl
from jax.experimental.pallas import tpu as pltpu


EMB_DIM = 32      # sinusoidal timestep embedding width
MLP_HIDDEN = 64   # time-MLP hidden width
CH_HIDDEN = 16    # hidden conv channels
OUT_CH = 4        # model output channels (matches x channels)


# ----------------------------------------------------------------------------
# Fused Pallas kernel: time-MLP + conv3x3 + SiLU + conv3x3 (one batch / step)
# ----------------------------------------------------------------------------

def _fused_kernel(*refs, C, H, W, PADL, use_cond):
    if use_cond:
        (emb_ref, x_ref, cond_ref,
         w1t_ref, b1_ref, w2t_ref, b2_ref,
         c1w_ref, c1b_ref, c2w_ref, c2b_ref,
         o_ref, xpad1_ref, xpad2_ref) = refs
    else:
        (emb_ref, x_ref,
         w1t_ref, b1_ref, w2t_ref, b2_ref,
         c1w_ref, c1b_ref, c2w_ref, c2b_ref,
         o_ref, xpad1_ref, xpad2_ref) = refs
        cond_ref = None

    HW = H * W

    # ---- time MLP, kept entirely in VMEM --------------------------------
    # Broadcast the (EMB,1) embedding column across all HW lanes so both MLP
    # matmuls have well-shaped (lane-dense) operands; temb is then directly
    # addable to the (CH_HIDDEN, HW) conv1 output (no transpose needed).
    e = jnp.broadcast_to(emb_ref[0], (EMB_DIM, HW))                  # (32, HW)
    hm = jnp.dot(w1t_ref[...], e,
                 preferred_element_type=jnp.float32) + b1_ref[...]  # (64, HW)
    hm = hm * jax.nn.sigmoid(hm)                                     # SiLU
    temb = jnp.dot(w2t_ref[...], hm,
                   preferred_element_type=jnp.float32) + b2_ref[...]  # (16,HW)

    # ---- column-validity masks for the dx=0 / dx=2 taps -----------------
    pos = jax.lax.broadcasted_iota(jnp.int32, (1, HW), 1)
    if (W & (W - 1)) == 0:            # power-of-two width: cheap bit mask
        col = pos & (W - 1)
    else:
        col = pos % W
    mask_l = col >= 1                 # source column w-1 is in range
    mask_r = col <= W - 2             # source column w+1 is in range

    def im2col(xpad_ref):
        """(Cin, PW) zero-padded flat image -> (9*Cin, HW) patch matrix.

        xpad_ref holds the image flattened to H*W on the lane axis with
        PADL zero lanes on each side.  For tap (dy, dx) the source flat
        index is p + (dy-1)*W + (dx-1); with the flat zero padding, the
        only remaining invalid reads are column wrap-arounds, which the
        two column masks remove exactly.
        """
        slabs = []
        for dy in range(3):
            for dx in range(3):
                start = PADL + (dy - 1) * W + (dx - 1)
                slab = xpad_ref[:, start:start + HW]
                if dx == 0:
                    slab = jnp.where(mask_l, slab, 0.0)
                elif dx == 2:
                    slab = jnp.where(mask_r, slab, 0.0)
                slabs.append(slab)
        return jnp.concatenate(slabs, axis=0)       # (9*Cin, HW)

    # ---- conv1: zero-pad in VMEM, im2col, one MXU matmul, bias+time+SiLU -
    xpad1_ref[...] = jnp.zeros(xpad1_ref.shape, xpad1_ref.dtype)
    xpad1_ref[0:C, PADL:PADL + HW] = x_ref[0]
    if use_cond:
        # channel order matches torch.cat([x, cond], dim=1)
        xpad1_ref[C:2 * C, PADL:PADL + HW] = cond_ref[0]
    h = jnp.dot(c1w_ref[...], im2col(xpad1_ref),
                preferred_element_type=jnp.float32)  # (CH_HIDDEN, HW)
    h = h + c1b_ref[...] + temb
    h = h * jax.nn.sigmoid(h)                        # SiLU

    # ---- conv2: h stays in VMEM, second im2col matmul --------------------
    xpad2_ref[...] = jnp.zeros(xpad2_ref.shape, xpad2_ref.dtype)
    xpad2_ref[:, PADL:PADL + HW] = h
    out = jnp.dot(c2w_ref[...], im2col(xpad2_ref),
                  preferred_element_type=jnp.float32)  # (OUT_CH, HW)
    out = out + c2b_ref[...]
    o_ref[0] = out.astype(o_ref.dtype)


# ----------------------------------------------------------------------------
# Parameters (stored directly in matmul-ready, channels-first layout)
# ----------------------------------------------------------------------------

def init_params(key, in_ch):
    ks = jax.random.split(key, 8)
    w1 = jax.random.normal(ks[0], (EMB_DIM, MLP_HIDDEN), jnp.float32) * 0.1
    w2 = jax.random.normal(ks[1], (MLP_HIDDEN, CH_HIDDEN), jnp.float32) * 0.1
    c1 = jax.random.normal(ks[2], (3, 3, in_ch, CH_HIDDEN), jnp.float32) * 0.1
    c2 = jax.random.normal(ks[3], (3, 3, CH_HIDDEN, OUT_CH), jnp.float32) * 0.1
    return {
        # time-MLP weights pre-transposed -> no in-kernel transposes.
        "mlp_w1t": w1.T,                                            # (64, 32)
        "mlp_b1": jax.random.normal(ks[4], (MLP_HIDDEN, 1), jnp.float32) * 0.1,
        "mlp_w2t": w2.T,                                            # (16, 64)
        "mlp_b2": jax.random.normal(ks[5], (CH_HIDDEN, 1), jnp.float32) * 0.1,
        # conv weights in im2col layout (Cout, 9*Cin), col = (dy*3+dx)*Cin+ci.
        "conv1_wm": c1.reshape(9 * in_ch, CH_HIDDEN).T,             # (16, 9*Cin)
        "conv1_b": jax.random.normal(ks[6], (CH_HIDDEN, 1), jnp.float32) * 0.1,
        "conv2_wm": c2.reshape(9 * CH_HIDDEN, OUT_CH).T,            # (4, 144)
        "conv2_b": jax.random.normal(ks[7], (OUT_CH, 1), jnp.float32) * 0.1,
    }


def timestep_embedding(t, dim):
    """Sinusoidal embedding of a float timestep vector (B,) -> (B, dim)."""
    half = dim // 2
    freqs = jnp.exp(-jnp.log(10000.0) * jnp.arange(half, dtype=jnp.float32) / half)
    args = t[:, None].astype(jnp.float32) * freqs[None, :]
    return jnp.concatenate([jnp.sin(args), jnp.cos(args)], axis=-1)


# ----------------------------------------------------------------------------
# DiffusionI2SB.forward
# ----------------------------------------------------------------------------

def diffusion_i2sb_forward(x, steps, noise_levels, params, cond=None,
                           use_cond=False):
    """t = noise_levels[steps]; x = cat([x, cond], 1) if cond; model(x, t).

    The channel concat is never materialized in HBM: x and cond go into the
    fused kernel as two inputs and are placed side by side in VMEM.
    """
    t = noise_levels[steps]
    assert t.ndim == 1 and t.shape[0] == x.shape[0]
    if use_cond:
        assert cond is not None and cond.shape == x.shape

    B, C, H, W = x.shape
    HW = H * W
    cin1 = 2 * C if use_cond else C
    PADL = ((W + 1 + 127) // 128) * 128        # lane-aligned zero pad >= W+1
    PW = 2 * PADL + HW                         # padded flat-image width

    emb = timestep_embedding(t, EMB_DIM).reshape(B, EMB_DIM, 1)

    # Free reshapes only: channels-first, H*W folded onto the lane axis.
    inputs = [emb, x.reshape(B, C, HW)]
    in_specs = [
        pl.BlockSpec((1, EMB_DIM, 1), lambda b: (b, 0, 0)),
        pl.BlockSpec((1, C, HW), lambda b: (b, 0, 0)),
    ]
    if use_cond:
        inputs.append(cond.reshape(B, C, HW))
        in_specs.append(pl.BlockSpec((1, C, HW), lambda b: (b, 0, 0)))
    for name in ("mlp_w1t", "mlp_b1", "mlp_w2t", "mlp_b2",
                 "conv1_wm", "conv1_b", "conv2_wm", "conv2_b"):
        arr = params[name]
        inputs.append(arr)
        in_specs.append(pl.BlockSpec(arr.shape, lambda b: (0, 0)))

    out = pl.pallas_call(
        functools.partial(_fused_kernel, C=C, H=H, W=W, PADL=PADL,
                          use_cond=use_cond),
        out_shape=jax.ShapeDtypeStruct((B, OUT_CH, HW), jnp.float32),
        grid=(B,),
        in_specs=in_specs,
        out_specs=pl.BlockSpec((1, OUT_CH, HW), lambda b: (b, 0, 0)),
        scratch_shapes=[
            pltpu.VMEM((cin1, PW), jnp.float32),        # padded conv1 input
            pltpu.VMEM((CH_HIDDEN, PW), jnp.float32),   # padded conv2 input
        ],
        compiler_params=pltpu.CompilerParams(
            dimension_semantics=("parallel",)),          # 2 steps -> 2 TCs on v7x
    )(*inputs)

    return out.reshape(B, OUT_CH, H, W)


# ----------------------------------------------------------------------------
# Pure-JAX reference (for correctness check only)
# ----------------------------------------------------------------------------

def reference_forward(x, steps, noise_levels, params, cond=None, use_cond=False):
    hp = jax.lax.Precision.HIGHEST
    t = noise_levels[steps]
    xin = jnp.concatenate([x, cond], axis=1) if use_cond else x

    emb = timestep_embedding(t, EMB_DIM)
    hm = jnp.dot(emb, params["mlp_w1t"].T, precision=hp) + params["mlp_b1"][:, 0]
    hm = hm * jax.nn.sigmoid(hm)
    temb = jnp.dot(hm, params["mlp_w2t"].T, precision=hp) + params["mlp_b2"][:, 0]

    def conv(z, wm, b):
        cin = z.shape[1]
        w_hwio = wm.T.reshape(3, 3, cin, wm.shape[0])
        y = jax.lax.conv_general_dilated(
            z, w_hwio, window_strides=(1, 1), padding="SAME",
            dimension_numbers=("NCHW", "HWIO", "NCHW"), precision=hp)
        return y + b[:, 0][None, :, None, None]

    h = conv(xin, params["conv1_wm"], params["conv1_b"])
    h = h + temb[:, :, None, None]
    h = h * jax.nn.sigmoid(h)
    return conv(h, params["conv2_wm"], params["conv2_b"])


# ----------------------------------------------------------------------------
# Demo
# ----------------------------------------------------------------------------

if __name__ == "__main__":
    B, C, H, W = 2, 4, 16, 16
    use_cond = True
    in_ch = 2 * C if use_cond else C

    key = jax.random.PRNGKey(0)
    kx, kc, kp = jax.random.split(key, 3)

    x = jax.random.normal(kx, (B, C, H, W), jnp.float32)
    cond = jax.random.normal(kc, (B, C, H, W), jnp.float32)
    steps = jnp.array([3, 7], dtype=jnp.int32)
    noise_levels = jnp.linspace(0.0, 1.0, 1000, dtype=jnp.float32)
    params = init_params(kp, in_ch)

    fwd = jax.jit(functools.partial(diffusion_i2sb_forward, use_cond=use_cond))
    out = jax.block_until_ready(fwd(x, steps, noise_levels, params, cond))
    assert out.shape == (B, OUT_CH, H, W)

    ref = reference_forward(x, steps, noise_levels, params,
                            cond=cond, use_cond=use_cond)
    err = jnp.max(jnp.abs(out - ref))
    assert jnp.allclose(out, ref, rtol=1e-2, atol=1e-2), f"max abs err {err}"

    print("KERNEL_OK")
</pallas_src>

<mosaic_0001>
module attributes {stable_mosaic.version = 11 : i64} {
  func.func @_fused_kernel(%arg0: i32, %arg1: memref<1x32x1xf32, #tpu.memory_space<vmem>>, %arg2: memref<1x4x256xf32, #tpu.memory_space<vmem>>, %arg3: memref<1x4x256xf32, #tpu.memory_space<vmem>>, %arg4: memref<64x32xf32, #tpu.memory_space<vmem>>, %arg5: memref<64x1xf32, #tpu.memory_space<vmem>>, %arg6: memref<16x64xf32, #tpu.memory_space<vmem>>, %arg7: memref<16x1xf32, #tpu.memory_space<vmem>>, %arg8: memref<16x72xf32, #tpu.memory_space<vmem>>, %arg9: memref<16x1xf32, #tpu.memory_space<vmem>>, %arg10: memref<4x144xf32, #tpu.memory_space<vmem>>, %arg11: memref<4x1xf32, #tpu.memory_space<vmem>>, %arg12: memref<1x4x256xf32, #tpu.memory_space<vmem>>, %arg13: memref<8x512xf32, #tpu.memory_space<vmem>>, %arg14: memref<16x512xf32, #tpu.memory_space<vmem>>) attributes {dimension_semantics = [#tpu.dimension_semantics<parallel>], iteration_bounds = array<i64: 2>, scalar_prefetch = 0 : i64, scratch_operands = 2 : i64, tpu.core_type = #tpu.core_type<tc>, window_params = [{transform_indices = @transform_0, window_bounds = array<i64: 1, 32, 1>}, {transform_indices = @transform_1, window_bounds = array<i64: 1, 4, 256>}, {transform_indices = @transform_2, window_bounds = array<i64: 1, 4, 256>}, {pipeline_mode = #tpu.pipeline_mode<synchronous>, transform_indices = @transform_3, window_bounds = array<i64: 64, 32>}, {pipeline_mode = #tpu.pipeline_mode<synchronous>, transform_indices = @transform_4, window_bounds = array<i64: 64, 1>}, {pipeline_mode = #tpu.pipeline_mode<synchronous>, transform_indices = @transform_5, window_bounds = array<i64: 16, 64>}, {pipeline_mode = #tpu.pipeline_mode<synchronous>, transform_indices = @transform_6, window_bounds = array<i64: 16, 1>}, {pipeline_mode = #tpu.pipeline_mode<synchronous>, transform_indices = @transform_7, window_bounds = array<i64: 16, 72>}, {pipeline_mode = #tpu.pipeline_mode<synchronous>, transform_indices = @transform_8, window_bounds = array<i64: 16, 1>}, {pipeline_mode = #tpu.pipeline_mode<synchronous>, transform_indices = @transform_9, window_bounds = array<i64: 4, 144>}, {pipeline_mode = #tpu.pipeline_mode<synchronous>, transform_indices = @transform_10, window_bounds = array<i64: 4, 1>}, {transform_indices = @transform_11, window_bounds = array<i64: 1, 4, 256>}]} {
    %c0 = arith.constant 0 : index
    %c0_0 = arith.constant 0 : index
    %c0_1 = arith.constant 0 : index
    %0 = vector.load %arg1[%c0, %c0_0, %c0_1] : memref<1x32x1xf32, #tpu.memory_space<vmem>>, vector<1x32x1xf32>
    %1 = vector.shape_cast %0 : vector<1x32x1xf32> to vector<32x1xf32>
    %2 = vector.shape_cast %1 : vector<32x1xf32> to vector<32x1xf32>
    %3 = vector.broadcast %2 : vector<32x1xf32> to vector<32x256xf32>
    %c0_2 = arith.constant 0 : index
    %c0_3 = arith.constant 0 : index
    %4 = vector.load %arg4[%c0_2, %c0_3] : memref<64x32xf32, #tpu.memory_space<vmem>>, vector<64x32xf32>
    %cst = arith.constant dense<0.000000e+00> : vector<64x256xf32>
    %5 = tpu.matmul %4, %3, %cst {dimension_numbers = #tpu.dot_dimension_numbers<[1], [0], [0], [1], [0, 0, 1, 1], [], []>} : vector<64x32xf32>, vector<32x256xf32>, vector<64x256xf32> -> vector<64x256xf32>
    %c0_4 = arith.constant 0 : index
    %c0_5 = arith.constant 0 : index
    %6 = vector.load %arg5[%c0_4, %c0_5] : memref<64x1xf32, #tpu.memory_space<vmem>>, vector<64x1xf32>
    %7 = vector.broadcast %6 : vector<64x1xf32> to vector<64x256xf32>
    %8 = arith.addf %5, %7 : vector<64x256xf32>
    %9 = arith.negf %8 : vector<64x256xf32>
    %10 = math.exp %9 : vector<64x256xf32>
    %cst_6 = arith.constant 1.000000e+00 : f32
    %11 = vector.broadcast %cst_6 : f32 to vector<64x256xf32>
    %12 = arith.addf %11, %10 : vector<64x256xf32>
    %13 = arith.divf %11, %12 : vector<64x256xf32>
    %14 = arith.mulf %8, %13 : vector<64x256xf32>
    %c0_7 = arith.constant 0 : index
    %c0_8 = arith.constant 0 : index
    %15 = vector.load %arg6[%c0_7, %c0_8] : memref<16x64xf32, #tpu.memory_space<vmem>>, vector<16x64xf32>
    %cst_9 = arith.constant dense<0.000000e+00> : vector<16x256xf32>
    %16 = tpu.matmul %15, %14, %cst_9 {dimension_numbers = #tpu.dot_dimension_numbers<[1], [0], [0], [1], [0, 0, 1, 1], [], []>} : vector<16x64xf32>, vector<64x256xf32>, vector<16x256xf32> -> vector<16x256xf32>
    %c0_10 = arith.constant 0 : index
    %c0_11 = arith.constant 0 : index
    %17 = vector.load %arg7[%c0_10, %c0_11] : memref<16x1xf32, #tpu.memory_space<vmem>>, vector<16x1xf32>
    %18 = vector.broadcast %17 : vector<16x1xf32> to vector<16x256xf32>
    %19 = arith.addf %16, %18 : vector<16x256xf32>
    %20 = tpu.iota {dimensions = array<i32: 1>} : vector<1x256xi32>
    %c15_i32 = arith.constant 15 : i32
    %21 = vector.broadcast %c15_i32 : i32 to vector<1x256xi32>
    %22 = arith.andi %20, %21 : vector<1x256xi32>
    %c1_i32 = arith.constant 1 : i32
    %23 = vector.broadcast %c1_i32 : i32 to vector<1x256xi32>
    %24 = arith.cmpi sge, %22, %23 : vector<1x256xi32>
    %c14_i32 = arith.constant 14 : i32
    %25 = vector.broadcast %c14_i32 : i32 to vector<1x256xi32>
    %26 = arith.cmpi sle, %22, %25 : vector<1x256xi32>
    %cst_12 = arith.constant 0.000000e+00 : f32
    %27 = vector.broadcast %cst_12 : f32 to vector<8x512xf32>
    %c0_13 = arith.constant 0 : index
    %c0_14 = arith.constant 0 : index
    %28 = vector.load %arg13[%c0_13, %c0_14] : memref<8x512xf32, #tpu.memory_space<vmem>>, vector<8x512xf32>
    tpu.vector_store %arg13[%c0_13, %c0_14], %27 {strides = array<i32>} : memref<8x512xf32, #tpu.memory_space<vmem>>, vector<8x512xf32>,
    %c0_15 = arith.constant 0 : index
    %c0_16 = arith.constant 0 : index
    %c0_17 = arith.constant 0 : index
    %29 = vector.load %arg2[%c0_15, %c0_16, %c0_17] : memref<1x4x256xf32, #tpu.memory_space<vmem>>, vector<1x4x256xf32>
    %30 = vector.shape_cast %29 : vector<1x4x256xf32> to vector<4x256xf32>
    %c0_18 = arith.constant 0 : index
    %c128 = arith.constant 128 : index
    %31 = vector.load %arg13[%c0_18, %c128] : memref<8x512xf32, #tpu.memory_space<vmem>>, vector<4x256xf32>
    tpu.vector_store %arg13[%c0_18, %c128], %30 {strides = array<i32>} : memref<8x512xf32, #tpu.memory_space<vmem>>, vector<4x256xf32>,
    %c0_19 = arith.constant 0 : index
    %c0_20 = arith.constant 0 : index
    %c0_21 = arith.constant 0 : index
    %32 = vector.load %arg3[%c0_19, %c0_20, %c0_21] : memref<1x4x256xf32, #tpu.memory_space<vmem>>, vector<1x4x256xf32>
    %33 = vector.shape_cast %32 : vector<1x4x256xf32> to vector<4x256xf32>
    %c4 = arith.constant 4 : index
    %c128_22 = arith.constant 128 : index
    %34 = vector.load %arg13[%c4, %c128_22] : memref<8x512xf32, #tpu.memory_space<vmem>>, vector<4x256xf32>
    tpu.vector_store %arg13[%c4, %c128_22], %33 {strides = array<i32>} : memref<8x512xf32, #tpu.memory_space<vmem>>, vector<4x256xf32>,
    %c0_23 = arith.constant 0 : index
    %c0_24 = arith.constant 0 : index
    %35 = vector.load %arg8[%c0_23, %c0_24] : memref<16x72xf32, #tpu.memory_space<vmem>>, vector<16x72xf32>
    %c0_25 = arith.constant 0 : index
    %c111 = arith.constant 111 : index
    %36 = vector.load %arg13[%c0_25, %c111] : memref<8x512xf32, #tpu.memory_space<vmem>>, vector<8x256xf32>
    %cst_26 = arith.constant 0.000000e+00 : f32
    %37 = vector.shape_cast %24 : vector<1x256xi1> to vector<1x256xi1>
    %38 = vector.broadcast %37 : vector<1x256xi1> to vector<8x256xi1>
    %39 = vector.broadcast %cst_26 : f32 to vector<8x256xf32>
    %40 = arith.select %38, %36, %39 : vector<8x256xi1>, vector<8x256xf32>
    %c0_27 = arith.constant 0 : index
    %c112 = arith.constant 112 : index
    %41 = vector.load %arg13[%c0_27, %c112] : memref<8x512xf32, #tpu.memory_space<vmem>>, vector<8x256xf32>
    %c0_28 = arith.constant 0 : index
    %c113 = arith.constant 113 : index
    %42 = vector.load %arg13[%c0_28, %c113] : memref<8x512xf32, #tpu.memory_space<vmem>>, vector<8x256xf32>
    %cst_29 = arith.constant 0.000000e+00 : f32
    %43 = vector.shape_cast %26 : vector<1x256xi1> to vector<1x256xi1>
    %44 = vector.broadcast %43 : vector<1x256xi1> to vector<8x256xi1>
    %45 = vector.broadcast %cst_29 : f32 to vector<8x256xf32>
    %46 = arith.select %44, %42, %45 : vector<8x256xi1>, vector<8x256xf32>
    %c0_30 = arith.constant 0 : index
    %c127 = arith.constant 127 : index
    %47 = vector.load %arg13[%c0_30, %c127] : memref<8x512xf32, #tpu.memory_space<vmem>>, vector<8x256xf32>
    %cst_31 = arith.constant 0.000000e+00 : f32
    %48 = vector.shape_cast %24 : vector<1x256xi1> to vector<1x256xi1>
    %49 = vector.broadcast %48 : vector<1x256xi1> to vector<8x256xi1>
    %50 = vector.broadcast %cst_31 : f32 to vector<8x256xf32>
    %51 = arith.select %49, %47, %50 : vector<8x256xi1>, vector<8x256xf32>
    %c0_32 = arith.constant 0 : index
    %c128_33 = arith.constant 128 : index
    %52 = vector.load %arg13[%c0_32, %c128_33] : memref<8x512xf32, #tpu.memory_space<vmem>>, vector<8x256xf32>
    %c0_34 = arith.constant 0 : index
    %c129 = arith.constant 129 : index
    %53 = vector.load %arg13[%c0_34, %c129] : memref<8x512xf32, #tpu.memory_space<vmem>>, vector<8x256xf32>
    %cst_35 = arith.constant 0.000000e+00 : f32
    %54 = vector.shape_cast %26 : vector<1x256xi1> to vector<1x256xi1>
    %55 = vector.broadcast %54 : vector<1x256xi1> to vector<8x256xi1>
    %56 = vector.broadcast %cst_35 : f32 to vector<8x256xf32>
    %57 = arith.select %55, %53, %56 : vector<8x256xi1>, vector<8x256xf32>
    %c0_36 = arith.constant 0 : index
    %c143 = arith.constant 143 : index
    %58 = vector.load %arg13[%c0_36, %c143] : memref<8x512xf32, #tpu.memory_space<vmem>>, vector<8x256xf32>
    %cst_37 = arith.constant 0.000000e+00 : f32
    %59 = vector.shape_cast %24 : vector<1x256xi1> to vector<1x256xi1>
    %60 = vector.broadcast %59 : vector<1x256xi1> to vector<8x256xi1>
    %61 = vector.broadcast %cst_37 : f32 to vector<8x256xf32>
    %62 = arith.select %60, %58, %61 : vector<8x256xi1>, vector<8x256xf32>
    %c0_38 = arith.constant 0 : index
    %c144 = arith.constant 144 : index
    %63 = vector.load %arg13[%c0_38, %c144] : memref<8x512xf32, #tpu.memory_space<vmem>>, vector<8x256xf32>
    %c0_39 = arith.constant 0 : index
    %c145 = arith.constant 145 : index
    %64 = vector.load %arg13[%c0_39, %c145] : memref<8x512xf32, #tpu.memory_space<vmem>>, vector<8x256xf32>
    %cst_40 = arith.constant 0.000000e+00 : f32
    %65 = vector.shape_cast %26 : vector<1x256xi1> to vector<1x256xi1>
    %66 = vector.broadcast %65 : vector<1x256xi1> to vector<8x256xi1>
    %67 = vector.broadcast %cst_40 : f32 to vector<8x256xf32>
    %68 = arith.select %66, %64, %67 : vector<8x256xi1>, vector<8x256xf32>
    %69 = tpu.concatenate %40, %41, %46, %51, %52, %57, %62, %63, %68 in 0 : vector<8x256xf32>, vector<8x256xf32>, vector<8x256xf32>, vector<8x256xf32>, vector<8x256xf32>, vector<8x256xf32>, vector<8x256xf32>, vector<8x256xf32>, vector<8x256xf32> -> vector<72x256xf32>
    %cst_41 = arith.constant dense<0.000000e+00> : vector<16x256xf32>
    %70 = tpu.matmul %35, %69, %cst_41 {dimension_numbers = #tpu.dot_dimension_numbers<[1], [0], [0], [1], [0, 0, 1, 1], [], []>} : vector<16x72xf32>, vector<72x256xf32>, vector<16x256xf32> -> vector<16x256xf32>
    %c0_42 = arith.constant 0 : index
    %c0_43 = arith.constant 0 : index
    %71 = vector.load %arg9[%c0_42, %c0_43] : memref<16x1xf32, #tpu.memory_space<vmem>>, vector<16x1xf32>
    %72 = vector.broadcast %71 : vector<16x1xf32> to vector<16x256xf32>
    %73 = arith.addf %70, %72 : vector<16x256xf32>
    %74 = arith.addf %73, %19 : vector<16x256xf32>
    %75 = arith.negf %74 : vector<16x256xf32>
    %76 = math.exp %75 : vector<16x256xf32>
    %cst_44 = arith.constant 1.000000e+00 : f32
    %77 = vector.broadcast %cst_44 : f32 to vector<16x256xf32>
    %78 = arith.addf %77, %76 : vector<16x256xf32>
    %79 = arith.divf %77, %78 : vector<16x256xf32>
    %80 = arith.mulf %74, %79 : vector<16x256xf32>
    %cst_45 = arith.constant 0.000000e+00 : f32
    %81 = vector.broadcast %cst_45 : f32 to vector<16x512xf32>
    %c0_46 = arith.constant 0 : index
    %c0_47 = arith.constant 0 : index
    %82 = vector.load %arg14[%c0_46, %c0_47] : memref<16x512xf32, #tpu.memory_space<vmem>>, vector<16x512xf32>
    tpu.vector_store %arg14[%c0_46, %c0_47], %81 {strides = array<i32>} : memref<16x512xf32, #tpu.memory_space<vmem>>, vector<16x512xf32>,
    %c0_48 = arith.constant 0 : index
    %c128_49 = arith.constant 128 : index
    %83 = vector.load %arg14[%c0_48, %c128_49] : memref<16x512xf32, #tpu.memory_space<vmem>>, vector<16x256xf32>
    tpu.vector_store %arg14[%c0_48, %c128_49], %80 {strides = array<i32>} : memref<16x512xf32, #tpu.memory_space<vmem>>, vector<16x256xf32>,
    %c0_50 = arith.constant 0 : index
    %c0_51 = arith.constant 0 : index
    %84 = vector.load %arg10[%c0_50, %c0_51] : memref<4x144xf32, #tpu.memory_space<vmem>>, vector<4x144xf32>
    %c0_52 = arith.constant 0 : index
    %c111_53 = arith.constant 111 : index
    %85 = vector.load %arg14[%c0_52, %c111_53] : memref<16x512xf32, #tpu.memory_space<vmem>>, vector<16x256xf32>
    %cst_54 = arith.constant 0.000000e+00 : f32
    %86 = vector.shape_cast %24 : vector<1x256xi1> to vector<1x256xi1>
    %87 = vector.broadcast %86 : vector<1x256xi1> to vector<16x256xi1>
    %88 = vector.broadcast %cst_54 : f32 to vector<16x256xf32>
    %89 = arith.select %87, %85, %88 : vector<16x256xi1>, vector<16x256xf32>
    %c0_55 = arith.constant 0 : index
    %c112_56 = arith.constant 112 : index
    %90 = vector.load %arg14[%c0_55, %c112_56] : memref<16x512xf32, #tpu.memory_space<vmem>>, vector<16x256xf32>
    %c0_57 = arith.constant 0 : index
    %c113_58 = arith.constant 113 : index
    %91 = vector.load %arg14[%c0_57, %c113_58] : memref<16x512xf32, #tpu.memory_space<vmem>>, vector<16x256xf32>
    %cst_59 = arith.constant 0.000000e+00 : f32
    %92 = vector.shape_cast %26 : vector<1x256xi1> to vector<1x256xi1>
    %93 = vector.broadcast %92 : vector<1x256xi1> to vector<16x256xi1>
    %94 = vector.broadcast %cst_59 : f32 to vector<16x256xf32>
    %95 = arith.select %93, %91, %94 : vector<16x256xi1>, vector<16x256xf32>
    %c0_60 = arith.constant 0 : index
    %c127_61 = arith.constant 127 : index
    %96 = vector.load %arg14[%c0_60, %c127_61] : memref<16x512xf32, #tpu.memory_space<vmem>>, vector<16x256xf32>
    %cst_62 = arith.constant 0.000000e+00 : f32
    %97 = vector.shape_cast %24 : vector<1x256xi1> to vector<1x256xi1>
    %98 = vector.broadcast %97 : vector<1x256xi1> to vector<16x256xi1>
    %99 = vector.broadcast %cst_62 : f32 to vector<16x256xf32>
    %100 = arith.select %98, %96, %99 : vector<16x256xi1>, vector<16x256xf32>
    %c0_63 = arith.constant 0 : index
    %c128_64 = arith.constant 128 : index
    %101 = vector.load %arg14[%c0_63, %c128_64] : memref<16x512xf32, #tpu.memory_space<vmem>>, vector<16x256xf32>
    %c0_65 = arith.constant 0 : index
    %c129_66 = arith.constant 129 : index
    %102 = vector.load %arg14[%c0_65, %c129_66] : memref<16x512xf32, #tpu.memory_space<vmem>>, vector<16x256xf32>
    %cst_67 = arith.constant 0.000000e+00 : f32
    %103 = vector.shape_cast %26 : vector<1x256xi1> to vector<1x256xi1>
    %104 = vector.broadcast %103 : vector<1x256xi1> to vector<16x256xi1>
    %105 = vector.broadcast %cst_67 : f32 to vector<16x256xf32>
    %106 = arith.select %104, %102, %105 : vector<16x256xi1>, vector<16x256xf32>
    %c0_68 = arith.constant 0 : index
    %c143_69 = arith.constant 143 : index
    %107 = vector.load %arg14[%c0_68, %c143_69] : memref<16x512xf32, #tpu.memory_space<vmem>>, vector<16x256xf32>
    %cst_70 = arith.constant 0.000000e+00 : f32
    %108 = vector.shape_cast %24 : vector<1x256xi1> to vector<1x256xi1>
    %109 = vector.broadcast %108 : vector<1x256xi1> to vector<16x256xi1>
    %110 = vector.broadcast %cst_70 : f32 to vector<16x256xf32>
    %111 = arith.select %109, %107, %110 : vector<16x256xi1>, vector<16x256xf32>
    %c0_71 = arith.constant 0 : index
    %c144_72 = arith.constant 144 : index
    %112 = vector.load %arg14[%c0_71, %c144_72] : memref<16x512xf32, #tpu.memory_space<vmem>>, vector<16x256xf32>
    %c0_73 = arith.constant 0 : index
    %c145_74 = arith.constant 145 : index
    %113 = vector.load %arg14[%c0_73, %c145_74] : memref<16x512xf32, #tpu.memory_space<vmem>>, vector<16x256xf32>
    %cst_75 = arith.constant 0.000000e+00 : f32
    %114 = vector.shape_cast %26 : vector<1x256xi1> to vector<1x256xi1>
    %115 = vector.broadcast %114 : vector<1x256xi1> to vector<16x256xi1>
    %116 = vector.broadcast %cst_75 : f32 to vector<16x256xf32>
    %117 = arith.select %115, %113, %116 : vector<16x256xi1>, vector<16x256xf32>
    %118 = tpu.concatenate %89, %90, %95, %100, %101, %106, %111, %112, %117 in 0 : vector<16x256xf32>, vector<16x256xf32>, vector<16x256xf32>, vector<16x256xf32>, vector<16x256xf32>, vector<16x256xf32>, vector<16x256xf32>, vector<16x256xf32>, vector<16x256xf32> -> vector<144x256xf32>
    %cst_76 = arith.constant dense<0.000000e+00> : vector<4x256xf32>
    %119 = tpu.matmul %84, %118, %cst_76 {dimension_numbers = #tpu.dot_dimension_numbers<[1], [0], [0], [1], [0, 0, 1, 1], [], []>} : vector<4x144xf32>, vector<144x256xf32>, vector<4x256xf32> -> vector<4x256xf32>
    %c0_77 = arith.constant 0 : index
    %c0_78 = arith.constant 0 : index
    %120 = vector.load %arg11[%c0_77, %c0_78] : memref<4x1xf32, #tpu.memory_space<vmem>>, vector<4x1xf32>
    %121 = vector.broadcast %120 : vector<4x1xf32> to vector<4x256xf32>
    %122 = arith.addf %119, %121 : vector<4x256xf32>
    %c0_79 = arith.constant 0 : index
    %c0_80 = arith.constant 0 : index
    %c0_81 = arith.constant 0 : index
    %123 = vector.load %arg12[%c0_79, %c0_80, %c0_81] : memref<1x4x256xf32, #tpu.memory_space<vmem>>, vector<1x4x256xf32>
    %124 = vector.shape_cast %123 : vector<1x4x256xf32> to vector<4x256xf32>
    %125 = vector.shape_cast %122 : vector<4x256xf32> to vector<1x4x256xf32>
    tpu.vector_store %arg12[%c0_79, %c0_80, %c0_81], %125 {strides = array<i32>} : memref<1x4x256xf32, #tpu.memory_space<vmem>>, vector<1x4x256xf32>,
    return
  }
  func.func @transform_0(%arg0: i32) -> (i32, i32, i32) {
    %c0_i32 = arith.constant 0 : i32
    %c0_i32_0 = arith.constant 0 : i32
    %c0_i32_1 = arith.constant 0 : i32
    return %arg0, %c0_i32, %c0_i32_0 : i32, i32, i32
  }
  func.func @transform_1(%arg0: i32) -> (i32, i32, i32) {
    %c0_i32 = arith.constant 0 : i32
    %c0_i32_0 = arith.constant 0 : i32
    %c0_i32_1 = arith.constant 0 : i32
    return %arg0, %c0_i32, %c0_i32_0 : i32, i32, i32
  }
  func.func @transform_2(%arg0: i32) -> (i32, i32, i32) {
    %c0_i32 = arith.constant 0 : i32
    %c0_i32_0 = arith.constant 0 : i32
    %c0_i32_1 = arith.constant 0 : i32
    return %arg0, %c0_i32, %c0_i32_0 : i32, i32, i32
  }
  func.func @transform_3(%arg0: i32) -> (i32, i32) {
    %c0_i32 = arith.constant 0 : i32
    %c0_i32_0 = arith.constant 0 : i32
    %c0_i32_1 = arith.constant 0 : i32
    return %c0_i32, %c0_i32_0 : i32, i32
  }
  func.func @transform_4(%arg0: i32) -> (i32, i32) {
    %c0_i32 = arith.constant 0 : i32
    %c0_i32_0 = arith.constant 0 : i32
    %c0_i32_1 = arith.constant 0 : i32
    return %c0_i32, %c0_i32_0 : i32, i32
  }
  func.func @transform_5(%arg0: i32) -> (i32, i32) {
    %c0_i32 = arith.constant 0 : i32
    %c0_i32_0 = arith.constant 0 : i32
    %c0_i32_1 = arith.constant 0 : i32
    return %c0_i32, %c0_i32_0 : i32, i32
  }
  func.func @transform_6(%arg0: i32) -> (i32, i32) {
    %c0_i32 = arith.constant 0 : i32
    %c0_i32_0 = arith.constant 0 : i32
    %c0_i32_1 = arith.constant 0 : i32
    return %c0_i32, %c0_i32_0 : i32, i32
  }
  func.func @transform_7(%arg0: i32) -> (i32, i32) {
    %c0_i32 = arith.constant 0 : i32
    %c0_i32_0 = arith.constant 0 : i32
    %c0_i32_1 = arith.constant 0 : i32
    return %c0_i32, %c0_i32_0 : i32, i32
  }
  func.func @transform_8(%arg0: i32) -> (i32, i32) {
    %c0_i32 = arith.constant 0 : i32
    %c0_i32_0 = arith.constant 0 : i32
    %c0_i32_1 = arith.constant 0 : i32
    return %c0_i32, %c0_i32_0 : i32, i32
  }
  func.func @transform_9(%arg0: i32) -> (i32, i32) {
    %c0_i32 = arith.constant 0 : i32
    %c0_i32_0 = arith.constant 0 : i32
    %c0_i32_1 = arith.constant 0 : i32
    return %c0_i32, %c0_i32_0 : i32, i32
  }
  func.func @transform_10(%arg0: i32) -> (i32, i32) {
    %c0_i32 = arith.constant 0 : i32
    %c0_i32_0 = arith.constant 0 : i32
    %c0_i32_1 = arith.constant 0 : i32
    return %c0_i32, %c0_i32_0 : i32, i32
  }
  func.func @transform_11(%arg0: i32) -> (i32, i32, i32) {
    %c0_i32 = arith.constant 0 : i32
    %c0_i32_0 = arith.constant 0 : i32
    %c0_i32_1 = arith.constant 0 : i32
    return %arg0, %c0_i32, %c0_i32_0 : i32, i32, i32
  }
}

</mosaic_0001>

<llo_original>
// kernel: diffusion_i2sb_forward.1
$region0: #{diffusion_i2sb_forward.1}
  #allocation0 [shape = 'u32[]', space=smem, size = 0x4, offset = 0x4, fixed_abs, tag = 'smem constant byte address 0x4 - core index']
  #allocation1 [shape = 'u32[144,128]{1,0:T(1,128)}', space=vmem, size = 0x12000, scoped, tag = 'internal scratch']
  #allocation2 [shape = 'f32[8,512]{1,0:T(8,128)}', space=vmem, size = 0x4000, scoped, tag = 'scratch operand']
  #allocation3 [shape = 'f32[16,512]{1,0:T(8,128)}', space=vmem, size = 0x8000, scoped, tag = 'scratch operand']
  %s0 = inlined_call_operand.vmem [shape: f32[2,32,1], index: 0, kind: input, shape index: {}]
  %s1 = inlined_call_operand.vmem [shape: f32[2,4,256], index: 1, kind: input, shape index: {}]
  %s2 = inlined_call_operand.vmem [shape: f32[2,4,256], index: 2, kind: input, shape index: {}]
  %s3 = inlined_call_operand.vmem [shape: f32[64,32], index: 3, kind: input, shape index: {}]
  %s4 = inlined_call_operand.vmem [shape: f32[64,1], index: 4, kind: input, shape index: {}]
  %s5 = inlined_call_operand.vmem [shape: f32[16,64], index: 5, kind: input, shape index: {}]
  %s6 = inlined_call_operand.vmem [shape: f32[16,1], index: 6, kind: input, shape index: {}]
  %s7 = inlined_call_operand.vmem [shape: f32[16,72], index: 7, kind: input, shape index: {}]
  %s8 = inlined_call_operand.vmem [shape: f32[16,1], index: 8, kind: input, shape index: {}]
  %s9 = inlined_call_operand.vmem [shape: f32[4,144], index: 9, kind: input, shape index: {}]
  %s10 = inlined_call_operand.vmem [shape: f32[4,1], index: 10, kind: input, shape index: {}]
  %s11 = inlined_call_operand.vmem [shape: f32[2,4,256], index: 11, kind: output, shape index: {}]
  %s12 = sld [smem:[#allocation0]]
  $region77: #{diffusion_i2sb_forward.1} parent=0
    _
  %s14 = ssub.s32 1, %s12
  %s15 = scalar_select 0, %s14, %s12
  loop: start=0, step=1, limit=4
  $region2: #{diffusion_i2sb_forward.1} parent=0 // loop_pre_header
    _
  $region3: #{diffusion_i2sb_forward.1} parent=0 // loop_header
    %s17 = sphi 0, %s21
    %p18 = scmp.ge.s32.totalorder %s17, 4
    %s27 = sphi 0, %s29
    %s30 = sphi 0, %s27
    %s31 = sphi 0, %s30
    %s47 = sphi 0, %s31
    %s53 = sphi 0, %s55
    %s56 = sphi 0, %s53
    %s57 = sphi 0, %s56
    %s73 = sphi 0, %s57
    %s79 = sphi 0, %s81
    %s82 = sphi 0, %s79
    %s83 = sphi 0, %s82
    %s99 = sphi 0, %s83
    %s103 = sphi 0, %s103
    %s105 = sphi 0, %s103
    %s106 = sphi 0, %s105
    %s120 = sphi 0, %s106
    %s124 = sphi 0, %s124
    %s126 = sphi 0, %s124
    %s127 = sphi 0, %s126
    %s141 = sphi 0, %s127
    %s145 = sphi 0, %s145
    %s147 = sphi 0, %s145
    %s148 = sphi 0, %s147
    %s162 = sphi 0, %s148
    %s166 = sphi 0, %s166
    %s168 = sphi 0, %s166
    %s169 = sphi 0, %s168
    %s183 = sphi 0, %s169
    %s187 = sphi 0, %s187
    %s189 = sphi 0, %s187
    %s190 = sphi 0, %s189
    %s204 = sphi 0, %s190
    %s208 = sphi 0, %s208
    %s210 = sphi 0, %s208
    %s211 = sphi 0, %s210
    %s225 = sphi 0, %s211
    %s229 = sphi 0, %s229
    %s231 = sphi 0, %s229
    %s232 = sphi 0, %s231
    %s246 = sphi 0, %s232
    %s250 = sphi 0, %s250
    %s252 = sphi 0, %s250
    %s253 = sphi 0, %s252
    %s267 = sphi 0, %s253
    %s273 = sphi 0, %s275
    %s276 = sphi 0, %s273
    %s277 = sphi 0, %s276
    %s293 = sphi 0, %s277
  $region4: #{diffusion_i2sb_forward.1} parent=0 // loop_header_branch
    %20 = sbr.rel (%p18) target = $region8
  $region5: #{diffusion_i2sb_forward.1} parent=0 // loop_body
    %s22 = ssub.s32 %s17, 1
    %s23 = ssub.s32 %s17, 2
    %s24 = sadd.s32 %s17, 1
    %s25 = ssub.s32 %s17, %s24
    %p26 = scmp.eq.s32.totalorder %s25, 0
    %s28 = sadd.s32 %s27, 1
    %s29 = scalar_select %p26, %s27, %s28
    %p32 = pneg %p26
    %p33 = scmp.eq.s32.totalorder %s17, 1
    %p34 = por %p32, %p33
    %p35 = scmp.ne.s32.totalorder %s27, %s30
    %p36 = scmp.eq.s32.totalorder %s17, 0
    %p37 = por %p35, %p36
    %p38 = scmp.ne.s32.totalorder %s27, %s30
    %p39 = scmp.eq.s32.totalorder %s22, 1
    %p40 = por %p38, %p39
    %p41 = scmp.ne.s32.totalorder %s30, %s31
    %p42 = scmp.eq.s32.totalorder %s22, 0
    %p43 = por %p41, %p42
    %p44 = scmp.ne.s32.totalorder %s30, %s31
    %p45 = scmp.eq.s32.totalorder %s23, 1
    %p46 = por %p44, %p45
    %p48 = scmp.ne.s32.totalorder %s31, %s47
    %p49 = scmp.eq.s32.totalorder %s23, 0
    %p50 = por %p48, %p49
    %s51 = ssub.s32 %s17, %s24
    %p52 = scmp.eq.s32.totalorder %s51, 0
    %s54 = sadd.s32 %s53, 1
    %s55 = scalar_select %p52, %s53, %s54
    %p58 = pneg %p52
    %p59 = scmp.eq.s32.totalorder %s17, 1
    %p60 = por %p58, %p59
    %p61 = scmp.ne.s32.totalorder %s53, %s56
    %p62 = scmp.eq.s32.totalorder %s17, 0
    %p63 = por %p61, %p62
    %p64 = scmp.ne.s32.totalorder %s53, %s56
    %p65 = scmp.eq.s32.totalorder %s22, 1
    %p66 = por %p64, %p65
    %p67 = scmp.ne.s32.totalorder %s56, %s57
    %p68 = scmp.eq.s32.totalorder %s22, 0
    %p69 = por %p67, %p68
    %p70 = scmp.ne.s32.totalorder %s56, %s57
    %p71 = scmp.eq.s32.totalorder %s23, 1
    %p72 = por %p70, %p71
    %p74 = scmp.ne.s32.totalorder %s57, %s73
    %p75 = scmp.eq.s32.totalorder %s23, 0
    %p76 = por %p74, %p75
    %s77 = ssub.s32 %s17, %s24
    %p78 = scmp.eq.s32.totalorder %s77, 0
    %s80 = sadd.s32 %s79, 1
    %s81 = scalar_select %p78, %s79, %s80
    %p84 = pneg %p78
    %p85 = scmp.eq.s32.totalorder %s17, 1
    %p86 = por %p84, %p85
    %p87 = scmp.ne.s32.totalorder %s79, %s82
    %p88 = scmp.eq.s32.totalorder %s17, 0
    %p89 = por %p87, %p88
    %p90 = scmp.ne.s32.totalorder %s79, %s82
    %p91 = scmp.eq.s32.totalorder %s22, 1
    %p92 = por %p90, %p91
    %p93 = scmp.ne.s32.totalorder %s82, %s83
    %p94 = scmp.eq.s32.totalorder %s22, 0
    %p95 = por %p93, %p94
    %p96 = scmp.ne.s32.totalorder %s82, %s83
    %p97 = scmp.eq.s32.totalorder %s23, 1
    %p98 = por %p96, %p97
    %p100 = scmp.ne.s32.totalorder %s83, %s99
    %p101 = scmp.eq.s32.totalorder %s23, 0
    %p102 = por %p100, %p101
    %s104 = sadd.s32 %s103, 1
    %p107 = scmp.eq.s32.totalorder %s17, 1
    %p108 = scmp.ne.s32.totalorder %s103, %s105
    %p109 = scmp.eq.s32.totalorder %s17, 0
    %p110 = por %p108, %p109
    %p111 = scmp.ne.s32.totalorder %s103, %s105
    %p112 = scmp.eq.s32.totalorder %s22, 1
    %p113 = por %p111, %p112
    %p114 = scmp.ne.s32.totalorder %s105, %s106
    %p115 = scmp.eq.s32.totalorder %s22, 0
    %p116 = por %p114, %p115
    %p117 = scmp.ne.s32.totalorder %s105, %s106
    %p118 = scmp.eq.s32.totalorder %s23, 1
    %p119 = por %p117, %p118
    %p121 = scmp.ne.s32.totalorder %s106, %s120
    %p122 = scmp.eq.s32.totalorder %s23, 0
    %p123 = por %p121, %p122
    %s125 = sadd.s32 %s124, 1
    %p128 = scmp.eq.s32.totalorder %s17, 1
    %p129 = scmp.ne.s32.totalorder %s124, %s126
    %p130 = scmp.eq.s32.totalorder %s17, 0
    %p131 = por %p129, %p130
    %p132 = scmp.ne.s32.totalorder %s124, %s126
    %p133 = scmp.eq.s32.totalorder %s22, 1
    %p134 = por %p132, %p133
    %p135 = scmp.ne.s32.totalorder %s126, %s127
    %p136 = scmp.eq.s32.totalorder %s22, 0
    %p137 = por %p135, %p136
    %p138 = scmp.ne.s32.totalorder %s126, %s127
    %p139 = scmp.eq.s32.totalorder %s23, 1
    %p140 = por %p138, %p139
    %p142 = scmp.ne.s32.totalorder %s127, %s141
    %p143 = scmp.eq.s32.totalorder %s23, 0
    %p144 = por %p142, %p143
    %s146 = sadd.s32 %s145, 1
    %p149 = scmp.eq.s32.totalorder %s17, 1
    %p150 = scmp.ne.s32.totalorder %s145, %s147
    %p151 = scmp.eq.s32.totalorder %s17, 0
    %p152 = por %p150, %p151
    %p153 = scmp.ne.s32.totalorder %s145, %s147
    %p154 = scmp.eq.s32.totalorder %s22, 1
    %p155 = por %p153, %p154
    %p156 = scmp.ne.s32.totalorder %s147, %s148
    %p157 = scmp.eq.s32.totalorder %s22, 0
    %p158 = por %p156, %p157
    %p159 = scmp.ne.s32.totalorder %s147, %s148
    %p160 = scmp.eq.s32.totalorder %s23, 1
    %p161 = por %p159, %p160
    %p163 = scmp.ne.s32.totalorder %s148, %s162
    %p164 = scmp.eq.s32.totalorder %s23, 0
    %p165 = por %p163, %p164
    %s167 = sadd.s32 %s166, 1
    %p170 = scmp.eq.s32.totalorder %s17, 1
    %p171 = scmp.ne.s32.totalorder %s166, %s168
    %p172 = scmp.eq.s32.totalorder %s17, 0
    %p173 = por %p171, %p172
    %p174 = scmp.ne.s32.totalorder %s166, %s168
    %p175 = scmp.eq.s32.totalorder %s22, 1
    %p176 = por %p174, %p175
    %p177 = scmp.ne.s32.totalorder %s168, %s169
    %p178 = scmp.eq.s32.totalorder %s22, 0
    %p179 = por %p177, %p178
    %p180 = scmp.ne.s32.totalorder %s168, %s169
    %p181 = scmp.eq.s32.totalorder %s23, 1
    %p182 = por %p180, %p181
    %p184 = scmp.ne.s32.totalorder %s169, %s183
    %p185 = scmp.eq.s32.totalorder %s23, 0
    %p186 = por %p184, %p185
    %s188 = sadd.s32 %s187, 1
    %p191 = scmp.eq.s32.totalorder %s17, 1
    %p192 = scmp.ne.s32.totalorder %s187, %s189
    %p193 = scmp.eq.s32.totalorder %s17, 0
    %p194 = por %p192, %p193
    %p195 = scmp.ne.s32.totalorder %s187, %s189
    %p196 = scmp.eq.s32.totalorder %s22, 1
    %p197 = por %p195, %p196
    %p198 = scmp.ne.s32.totalorder %s189, %s190
    %p199 = scmp.eq.s32.totalorder %s22, 0
    %p200 = por %p198, %p199
    %p201 = scmp.ne.s32.totalorder %s189, %s190
    %p202 = scmp.eq.s32.totalorder %s23, 1
    %p203 = por %p201, %p202
    %p205 = scmp.ne.s32.totalorder %s190, %s204
    %p206 = scmp.eq.s32.totalorder %s23, 0
    %p207 = por %p205, %p206
    %s209 = sadd.s32 %s208, 1
    %p212 = scmp.eq.s32.totalorder %s17, 1
    %p213 = scmp.ne.s32.totalorder %s208, %s210
    %p214 = scmp.eq.s32.totalorder %s17, 0
    %p215 = por %p213, %p214
    %p216 = scmp.ne.s32.totalorder %s208, %s210
    %p217 = scmp.eq.s32.totalorder %s22, 1
    %p218 = por %p216, %p217
    %p219 = scmp.ne.s32.totalorder %s210, %s211
    %p220 = scmp.eq.s32.totalorder %s22, 0
    %p221 = por %p219, %p220
    %p222 = scmp.ne.s32.totalorder %s210, %s211
    %p223 = scmp.eq.s32.totalorder %s23, 1
    %p224 = por %p222, %p223
    %p226 = scmp.ne.s32.totalorder %s211, %s225
    %p227 = scmp.eq.s32.totalorder %s23, 0
    %p228 = por %p226, %p227
    %s230 = sadd.s32 %s229, 1
    %p233 = scmp.eq.s32.totalorder %s17, 1
    %p234 = scmp.ne.s32.totalorder %s229, %s231
    %p235 = scmp.eq.s32.totalorder %s17, 0
    %p236 = por %p234, %p235
    %p237 = scmp.ne.s32.totalorder %s229, %s231
    %p238 = scmp.eq.s32.totalorder %s22, 1
    %p239 = por %p237, %p238
    %p240 = scmp.ne.s32.totalorder %s231, %s232
    %p241 = scmp.eq.s32.totalorder %s22, 0
    %p242 = por %p240, %p241
    %p243 = scmp.ne.s32.totalorder %s231, %s232
    %p244 = scmp.eq.s32.totalorder %s23, 1
    %p245 = por %p243, %p244
    %p247 = scmp.ne.s32.totalorder %s232, %s246
    %p248 = scmp.eq.s32.totalorder %s23, 0
    %p249 = por %p247, %p248
    %s251 = sadd.s32 %s250, 1
    %p254 = scmp.eq.s32.totalorder %s17, 1
    %p255 = scmp.ne.s32.totalorder %s250, %s252
    %p256 = scmp.eq.s32.totalorder %s17, 0
    %p257 = por %p255, %p256
    %p258 = scmp.ne.s32.totalorder %s250, %s252
    %p259 = scmp.eq.s32.totalorder %s22, 1
    %p260 = por %p258, %p259
    %p261 = scmp.ne.s32.totalorder %s252, %s253
    %p262 = scmp.eq.s32.totalorder %s22, 0
    %p263 = por %p261, %p262
    %p264 = scmp.ne.s32.totalorder %s252, %s253
    %p265 = scmp.eq.s32.totalorder %s23, 1
    %p266 = por %p264, %p265
    %p268 = scmp.ne.s32.totalorder %s253, %s267
    %p269 = scmp.eq.s32.totalorder %s23, 0
    %p270 = por %p268, %p269
    %s271 = ssub.s32 %s17, %s24
    %p272 = scmp.eq.s32.totalorder %s271, 0
    %s274 = sadd.s32 %s273, 1
    %s275 = scalar_select %p272, %s273, %s274
    %p278 = pneg %p272
    %p279 = scmp.eq.s32.totalorder %s17, 1
    %p280 = por %p278, %p279
    %p281 = scmp.ne.s32.totalorder %s273, %s276
    %p282 = scmp.eq.s32.totalorder %s17, 0
    %p283 = por %p281, %p282
    %p284 = scmp.ne.s32.totalorder %s273, %s276
    %p285 = scmp.eq.s32.totalorder %s22, 1
    %p286 = por %p284, %p285
    %p287 = scmp.ne.s32.totalorder %s276, %s277
    %p288 = scmp.eq.s32.totalorder %s22, 0
    %p289 = por %p287, %p288
    %p290 = scmp.ne.s32.totalorder %s276, %s277
    %p291 = scmp.eq.s32.totalorder %s23, 1
    %p292 = por %p290, %p291
    %p294 = scmp.ne.s32.totalorder %s277, %s293
    %p295 = scmp.eq.s32.totalorder %s23, 0
    %p296 = por %p294, %p295
    %p297 = scmp.le.s32.totalorder 1, %s17
    %p298 = scmp.lt.s32.totalorder %s17, 3
    %p299 = pnand %p297, %p298
    %p300 = pneg %p299
    // Predicated region
    $region9: #{diffusion_i2sb_forward.1} parent=5 // pred_check
      _
    $region10: #{diffusion_i2sb_forward.1} parent=5 // pred_check_branch
      %302 = sbr.rel (%p299) target = $region12
    $region11: #{diffusion_i2sb_forward.1} parent=5 // pred_region
      %s303 = ssub.s32 %s17, 1
      // Predicated region
      $region13: #{diffusion_i2sb_forward.1} parent=11 // pred_check
        %p304 = pneg %p116
      $region14: #{diffusion_i2sb_forward.1} parent=11 // pred_check_branch
        %306 = sbr.rel (%p304) target = $region16
      $region15: #{diffusion_i2sb_forward.1} parent=11 // pred_region
        _
      $region16: #{diffusion_i2sb_forward.1} parent=11 // pred_fallthru
        _
      // Predicated region
      $region17: #{diffusion_i2sb_forward.1} parent=11 // pred_check
        %p307 = pneg %p137
      $region18: #{diffusion_i2sb_forward.1} parent=11 // pred_check_branch
        %309 = sbr.rel (%p307) target = $region20
      $region19: #{diffusion_i2sb_forward.1} parent=11 // pred_region
        _
      $region20: #{diffusion_i2sb_forward.1} parent=11 // pred_fallthru
        _
      // Predicated region
      $region21: #{diffusion_i2sb_forward.1} parent=11 // pred_check
        %p310 = pneg %p158
      $region22: #{diffusion_i2sb_forward.1} parent=11 // pred_check_branch
        %312 = sbr.rel (%p310) target = $region24
      $region23: #{diffusion_i2sb_forward.1} parent=11 // pred_region
        _
      $region24: #{diffusion_i2sb_forward.1} parent=11 // pred_fallthru
        _
      // Predicated region
      $region25: #{diffusion_i2sb_forward.1} parent=11 // pred_check
        %p313 = pneg %p179
      $region26: #{diffusion_i2sb_forward.1} parent=11 // pred_check_branch
        %315 = sbr.rel (%p313) target = $region28
      $region27: #{diffusion_i2sb_forward.1} parent=11 // pred_region
        _
      $region28: #{diffusion_i2sb_forward.1} parent=11 // pred_fallthru
        _
      // Predicated region
      $region29: #{diffusion_i2sb_forward.1} parent=11 // pred_check
        %p316 = pneg %p200
      $region30: #{diffusion_i2sb_forward.1} parent=11 // pred_check_branch
        %318 = sbr.rel (%p316) target = $region32
      $region31: #{diffusion_i2sb_forward.1} parent=11 // pred_region
        _
      $region32: #{diffusion_i2sb_forward.1} parent=11 // pred_fallthru
        _
      // Predicated region
      $region33: #{diffusion_i2sb_forward.1} parent=11 // pred_check
        %p319 = pneg %p221
      $region34: #{diffusion_i2sb_forward.1} parent=11 // pred_check_branch
        %321 = sbr.rel (%p319) target = $region36
      $region35: #{diffusion_i2sb_forward.1} parent=11 // pred_region
        _
      $region36: #{diffusion_i2sb_forward.1} parent=11 // pred_fallthru
        _
      // Predicated region
      $region37: #{diffusion_i2sb_forward.1} parent=11 // pred_check
        %p322 = pneg %p242
      $region38: #{diffusion_i2sb_forward.1} parent=11 // pred_check_branch
        %324 = sbr.rel (%p322) target = $region40
      $region39: #{diffusion_i2sb_forward.1} parent=11 // pred_region
        _
      $region40: #{diffusion_i2sb_forward.1} parent=11 // pred_fallthru
        _
      // Predicated region
      $region41: #{diffusion_i2sb_forward.1} parent=11 // pred_check
        %p325 = pneg %p263
      $region42: #{diffusion_i2sb_forward.1} parent=11 // pred_check_branch
        %327 = sbr.rel (%p325) target = $region44
      $region43: #{diffusion_i2sb_forward.1} parent=11 // pred_region
        _
      $region44: #{diffusion_i2sb_forward.1} parent=11 // pred_fallthru
        _
    $region12: #{diffusion_i2sb_forward.1} parent=5 // pred_fallthru
      _
    %p328 = scmp.lt.s32.totalorder %s17, 2
    // Predicated region
    $region45: #{diffusion_i2sb_forward.1} parent=5 // pred_check
      %p329 = pneg %p328
    $region46: #{diffusion_i2sb_forward.1} parent=5 // pred_check_branch
      %331 = sbr.rel (%p329) target = $region48
    $region47: #{diffusion_i2sb_forward.1} parent=5 // pred_region
      // Predicated region
      $region49: #{diffusion_i2sb_forward.1} parent=47 // pred_check
        %p332 = pneg %p37
      $region50: #{diffusion_i2sb_forward.1} parent=47 // pred_check_branch
        %334 = sbr.rel (%p332) target = $region52
      $region51: #{diffusion_i2sb_forward.1} parent=47 // pred_region
        %p335 = scmp.lt.s32.totalorder %s17, 1
        %s336 = scalar_select %p335, %s17, 1
        %s337 = smul.addr %s336, 4
        %s338 = smul.addr %s337, 8
        %s339 = scalar_lea.vmem %s0, %s338
      $region52: #{diffusion_i2sb_forward.1} parent=47 // pred_fallthru
        _
      // Predicated region
      $region53: #{diffusion_i2sb_forward.1} parent=47 // pred_check
        %p340 = pneg %p63
      $region54: #{diffusion_i2sb_forward.1} parent=47 // pred_check_branch
        %342 = sbr.rel (%p340) target = $region56
      $region55: #{diffusion_i2sb_forward.1} parent=47 // pred_region
        %p343 = scmp.lt.s32.totalorder %s17, 1
        %s344 = scalar_select %p343, %s17, 1
        %s345 = smul.addr %s344, 2
        %s346 = smul.addr %s345, 4
        %s347 = scalar_lea.vmem %s1, %s346
      $region56: #{diffusion_i2sb_forward.1} parent=47 // pred_fallthru
        _
      // Predicated region
      $region57: #{diffusion_i2sb_forward.1} parent=47 // pred_check
        %p348 = pneg %p89
      $region58: #{diffusion_i2sb_forward.1} parent=47 // pred_check_branch
        %350 = sbr.rel (%p348) target = $region60
      $region59: #{diffusion_i2sb_forward.1} parent=47 // pred_region
        %p351 = scmp.lt.s32.totalorder %s17, 1
        %s352 = scalar_select %p351, %s17, 1
        %s353 = smul.addr %s352, 2
        %s354 = smul.addr %s353, 4
        %s355 = scalar_lea.vmem %s2, %s354
      $region60: #{diffusion_i2sb_forward.1} parent=47 // pred_fallthru
        _
    $region48: #{diffusion_i2sb_forward.1} parent=5 // pred_fallthru
      _
    %p356 = scmp.le.s32.totalorder 1, %s17
    %p357 = scmp.lt.s32.totalorder %s17, 3
    %p358 = pnand %p356, %p357
    %p359 = pneg %p358
    // Predicated region
    $region61: #{diffusion_i2sb_forward.1} parent=5 // pred_check
      _
    $region62: #{diffusion_i2sb_forward.1} parent=5 // pred_check_branch
      %361 = sbr.rel (%p358) target = $region64
    $region63: #{diffusion_i2sb_forward.1} parent=5 // pred_region
      %s362 = ssub.s32 %s17, 1
      %p363 = scmp.lt.s32.totalorder %s22, 1
      %s364 = scalar_select %p363, %s22, 1
      %s365 = smul.addr %s364, 4
      %s366 = smul.addr %s365, 8
      %s367 = scalar_lea.vmem %s0, %s366
      %p368 = pneg %p43
      %p369 = pneg %p40
      %p370 = scmp.lt.s32.totalorder %s22, 1
      %s371 = scalar_select %p370, %s22, 1
      %s372 = smul.addr %s371, 2
      %s373 = smul.addr %s372, 4
      %s374 = scalar_lea.vmem %s1, %s373
      %p375 = pneg %p69
      %p376 = pneg %p66
      %p377 = scmp.lt.s32.totalorder %s22, 1
      %s378 = scalar_select %p377, %s22, 1
      %s379 = smul.addr %s378, 2
      %s380 = smul.addr %s379, 4
      %s381 = scalar_lea.vmem %s2, %s380
      %p382 = pneg %p95
      %p383 = pneg %p92
      %p384 = pneg %p116
      %p385 = pneg %p113
      %p386 = pneg %p137
      %p387 = pneg %p134
      %p388 = pneg %p158
      %p389 = pneg %p155
      %p390 = pneg %p179
      %p391 = pneg %p176
      %p392 = pneg %p200
      %p393 = pneg %p197
      %p394 = pneg %p221
      %p395 = pneg %p218
      %p396 = pneg %p242
      %p397 = pneg %p239
      %p398 = pneg %p263
      %p399 = pneg %p260
      %p400 = pneg %p289
      %p401 = pneg %p286
      %p402 = scmp.lt.s32.totalorder %s22, 1
      %s403 = scalar_select %p402, %s22, 1
      %s404 = smul.addr %s403, 2
      %s405 = smul.addr %s404, 4
      %s406 = scalar_lea.vmem %s11, %s405
      %p407 = scmp.lt.s32.totalorder %s22, 1
      %s408 = scalar_select %p407, %s22, 1
      %s409 = smul.addr %s408, 4
      %s410 = smul.addr %s409, 8
      %s411 = scalar_lea.vmem %s0, %s410
      %p412 = scmp.lt.s32.totalorder %s22, 1
      %s413 = scalar_select %p412, %s22, 1
      %s414 = smul.addr %s413, 2
      %s415 = smul.addr %s414, 4
      %s416 = scalar_lea.vmem %s1, %s415
      %p417 = scmp.lt.s32.totalorder %s22, 1
      %s418 = scalar_select %p417, %s22, 1
      %s419 = smul.addr %s418, 2
      %s420 = smul.addr %s419, 4
      %s421 = scalar_lea.vmem %s2, %s420
      %p422 = scmp.lt.s32.totalorder %s22, 1
      %s423 = scalar_select %p422, %s22, 1
      %s424 = smul.addr %s423, 2
      %s425 = smul.addr %s424, 4
      %s426 = scalar_lea.vmem %s11, %s425
      %v427 = vld [vmem:[%s411] sm:$0xff]
      %v428 = vld [vmem:[%s411 + $0x8] sm:$0xff]
      %v429 = vld [vmem:[%s411 + $0x10] sm:$0xff]
      %v430 = vld [vmem:[%s411 + $0x18] sm:$0xff]
      %432 = vset.pattern.permute.xlu0 0
      %433 = vperm.xlu0 %432, %v427
      %v434 = vpop.permute.xlu0 %433
      %437 = vset.pattern.permute.xlu0 0
      %438 = vperm.xlu0 %437, %v428
      %v439 = vpop.permute.xlu0 %438
      %442 = vset.pattern.permute.xlu0 0
      %443 = vperm.xlu0 %442, %v429
      %v444 = vpop.permute.xlu0 %443
      %447 = vset.pattern.permute.xlu0 0
      %448 = vperm.xlu0 %447, %v430
      %v449 = vpop.permute.xlu0 %448
      %v451 = vld [vmem:[%s3] sm:$0xff]
      %v452 = vld [vmem:[%s3 + $0x8] sm:$0xff]
      %v453 = vld [vmem:[%s3 + $0x10] sm:$0xff]
      %v454 = vld [vmem:[%s3 + $0x18] sm:$0xff]
      %v455 = vld [vmem:[%s3 + $0x20] sm:$0xff]
      %v456 = vld [vmem:[%s3 + $0x28] sm:$0xff]
      %v457 = vld [vmem:[%s3 + $0x30] sm:$0xff]
      %v458 = vld [vmem:[%s3 + $0x38] sm:$0xff]
      %v459 = vld [vmem:[%s4] sm:$0xff]
      %v460 = vld [vmem:[%s4 + $0x8] sm:$0xff]
      %v461 = vld [vmem:[%s4 + $0x10] sm:$0xff]
      %v462 = vld [vmem:[%s4 + $0x18] sm:$0xff]
      %v463 = vld [vmem:[%s4 + $0x20] sm:$0xff]
      %v464 = vld [vmem:[%s4 + $0x28] sm:$0xff]
      %v465 = vld [vmem:[%s4 + $0x30] sm:$0xff]
      %v466 = vld [vmem:[%s4 + $0x38] sm:$0xff]
      %468 = vset.pattern.permute.xlu0 0
      %469 = vperm.xlu0 %468, %v459
      %v470 = vpop.permute.xlu0 %469
      %473 = vset.pattern.permute.xlu0 0
      %474 = vperm.xlu0 %473, %v460
      %v475 = vpop.permute.xlu0 %474
      %478 = vset.pattern.permute.xlu0 0
      %479 = vperm.xlu0 %478, %v461
      %v480 = vpop.permute.xlu0 %479
      %483 = vset.pattern.permute.xlu0 0
      %484 = vperm.xlu0 %483, %v462
      %v485 = vpop.permute.xlu0 %484
      %488 = vset.pattern.permute.xlu0 0
      %489 = vperm.xlu0 %488, %v463
      %v490 = vpop.permute.xlu0 %489
      %493 = vset.pattern.permute.xlu0 0
      %494 = vperm.xlu0 %493, %v464
      %v495 = vpop.permute.xlu0 %494
      %498 = vset.pattern.permute.xlu0 0
      %499 = vperm.xlu0 %498, %v465
      %v500 = vpop.permute.xlu0 %499
      %503 = vset.pattern.permute.xlu0 0
      %504 = vperm.xlu0 %503, %v466
      %v505 = vpop.permute.xlu0 %504
      %vm507 = vcmask 261120
      %v509 = vsel %vm507, %v451, 0
      %v512 = vsel %vm507, %v452, 0
      %v515 = vsel %vm507, %v453, 0
      %v518 = vsel %vm507, %v454, 0
      %v521 = vsel %vm507, %v455, 0
      %v524 = vsel %vm507, %v456, 0
      %v527 = vsel %vm507, %v457, 0
      %v530 = vsel %vm507, %v458, 0
      %532 = vmatprep.subr.mxu0 0.0
      %533 = vmatpush1.msra.mxu0 0.0
      %534 = vmatprep.subr.mxu0 0.0
      %535 = vmatpush1.msra.mxu0 0.0
      %536 = vmatprep.subr.mxu0 0.0
      %537 = vmatpush1.msra.mxu0 0.0
      %538 = vmatprep.subr.mxu0 0.0
      %539 = vmatpush1.msra.mxu0 0.0
      %540 = vmatprep.subr.mxu0 0.0
      %541 = vmatpush1.msra.mxu0 0.0
      %542 = vmatprep.subr.mxu0 0.0
      %543 = vmatpush1.msra.mxu0 0.0
      %544 = vmatprep.subr.mxu0 0.0
      %545 = vmatpush1.msra.mxu0 0.0
      %546 = vmatprep.subr.mxu0 0.0
      %547 = vmatpush1.msra.mxu0 0.0
      %548 = vmatprep.subr.mxu0 0.0
      %549 = vmatpush1.msra.mxu0 0.0
      %550 = vmatprep.subr.mxu0 0.0
      %551 = vmatpush1.msra.mxu0 0.0
      %552 = vmatprep.subr.mxu0 0.0
      %553 = vmatpush1.msra.mxu0 0.0
      %554 = vmatprep.subr.mxu0 0.0
      %555 = vmatpush1.msra.mxu0 0.0
      %556 = vmatprep.subr.mxu0 %v449
      %557 = vmatpush1.msra.mxu0 %v449
      %558 = vmatprep.subr.mxu0 %v444
      %559 = vmatpush1.msra.mxu0 %v444
      %560 = vmatprep.subr.mxu0 %v439
      %561 = vmatpush1.msra.mxu0 %v439
      %562 = vmatprep.subr.mxu0 %v434
      %563 = vmatpush1.msra.mxu0 %v434
      %564 = vmatprep.subr.mxu0 0.0
      %565 = vmatpush2.msra.mxu0 0.0
      %566 = vmatprep.subr.mxu0 0.0
      %567 = vmatpush2.msra.mxu0 0.0
      %568 = vmatprep.subr.mxu0 0.0
      %569 = vmatpush2.msra.mxu0 0.0
      %570 = vmatprep.subr.mxu0 0.0
      %571 = vmatpush2.msra.mxu0 0.0
      %572 = vmatprep.subr.mxu0 0.0
      %573 = vmatpush2.msra.mxu0 0.0
      %574 = vmatprep.subr.mxu0 0.0
      %575 = vmatpush2.msra.mxu0 0.0
      %576 = vmatprep.subr.mxu0 0.0
      %577 = vmatpush2.msra.mxu0 0.0
      %578 = vmatprep.subr.mxu0 0.0
      %579 = vmatpush2.msra.mxu0 0.0
      %580 = vmatprep.subr.mxu0 0.0
      %581 = vmatpush2.msra.mxu0 0.0
      %582 = vmatprep.subr.mxu0 0.0
      %583 = vmatpush2.msra.mxu0 0.0
      %584 = vmatprep.subr.mxu0 0.0
      %585 = vmatpush2.msra.mxu0 0.0
      %586 = vmatprep.subr.mxu0 0.0
      %587 = vmatpush2.msra.mxu0 0.0
      %588 = vmatprep.subr.mxu0 0.0
      %589 = vmatpush2.msra.mxu0 0.0
      %590 = vmatprep.subr.mxu0 0.0
      %591 = vmatpush2.msra.mxu0 0.0
      %592 = vmatprep.subr.mxu0 0.0
      %593 = vmatpush2.msra.mxu0 0.0
      %594 = vmatprep.subr.mxu0 0.0
      %595 = vmatpush2.msra.mxu0 0.0
      %596 = vmatprep.mubr.f32.mxu0 0.0
      %597 = vmatmul.mubr.f32.gmra.mxu0 %v509
      %v598 = vpop.f32.mrf.mxu0
      %v599 = vadd.f32 %v470, %v598
      %v600 = vpop.f32.mrf.mxu0
      %v601 = vadd.f32 %v470, %v600
      %602 = vmatprep.mubr.f32.mxu0 0.0
      %603 = vmatmul.mubr.f32.gmra.mxu0 %v512
      %v604 = vpop.f32.mrf.mxu0
      %v605 = vadd.f32 %v475, %v604
      %v606 = vpop.f32.mrf.mxu0
      %v607 = vadd.f32 %v475, %v606
      %608 = vmatprep.mubr.f32.mxu0 0.0
      %609 = vmatmul.mubr.f32.gmra.mxu0 %v515
      %v610 = vpop.f32.mrf.mxu0
      %v611 = vadd.f32 %v480, %v610
      %v612 = vpop.f32.mrf.mxu0
      %v613 = vadd.f32 %v480, %v612
      %614 = vmatprep.mubr.f32.mxu0 0.0
      %615 = vmatmul.mubr.f32.gmra.mxu0 %v518
      %v616 = vpop.f32.mrf.mxu0
      %v617 = vadd.f32 %v485, %v616
      %v618 = vpop.f32.mrf.mxu0
      %v619 = vadd.f32 %v485, %v618
      %620 = vmatprep.mubr.f32.mxu0 0.0
      %621 = vmatmul.mubr.f32.gmra.mxu0 %v521
      %v622 = vpop.f32.mrf.mxu0
      %v623 = vadd.f32 %v490, %v622
      %v624 = vpop.f32.mrf.mxu0
      %v625 = vadd.f32 %v490, %v624
      %626 = vmatprep.mubr.f32.mxu0 0.0
      %627 = vmatmul.mubr.f32.gmra.mxu0 %v524
      %v628 = vpop.f32.mrf.mxu0
      %v629 = vadd.f32 %v495, %v628
      %v630 = vpop.f32.mrf.mxu0
      %v631 = vadd.f32 %v495, %v630
      %632 = vmatprep.mubr.f32.mxu0 0.0
      %633 = vmatmul.mubr.f32.gmra.mxu0 %v527
      %v634 = vpop.f32.mrf.mxu0
      %v635 = vadd.f32 %v500, %v634
      %v636 = vpop.f32.mrf.mxu0
      %v637 = vadd.f32 %v500, %v636
      %638 = vmatprep.mubr.f32.mxu0 0.0
      %639 = vmatmul.mubr.f32.gmra.mxu0 %v530
      %v640 = vpop.f32.mrf.mxu0
      %v641 = vadd.f32 %v505, %v640
      %v642 = vpop.f32.mrf.mxu0
      %v643 = vadd.f32 %v505, %v642
      %644 = vdwg.mxu0
      %v645 = vxor.u32 %v599, 2147483648
      %v646 = vxor.u32 %v601, 2147483648
      %v647 = vxor.u32 %v605, 2147483648
      %v648 = vxor.u32 %v607, 2147483648
      %v649 = vxor.u32 %v611, 2147483648
      %v650 = vxor.u32 %v613, 2147483648
      %v651 = vxor.u32 %v617, 2147483648
      %v652 = vxor.u32 %v619, 2147483648
      %v653 = vxor.u32 %v623, 2147483648
      %v654 = vxor.u32 %v625, 2147483648
      %v655 = vxor.u32 %v629, 2147483648
      %v656 = vxor.u32 %v631, 2147483648
      %v657 = vxor.u32 %v635, 2147483648
      %v658 = vxor.u32 %v637, 2147483648
      %v659 = vxor.u32 %v641, 2147483648
      %v660 = vxor.u32 %v643, 2147483648
      %v661 = vmul.f32 %v645, 1.442695
      %v662 = vpow.pop %v661
      %v663 = vmul.f32 %v646, 1.442695
      %v664 = vpow.pop %v663
      %v665 = vmul.f32 %v647, 1.442695
      %v666 = vpow.pop %v665
      %v667 = vmul.f32 %v648, 1.442695
      %v668 = vpow.pop %v667
      %v669 = vmul.f32 %v649, 1.442695
      %v670 = vpow.pop %v669
      %v671 = vmul.f32 %v650, 1.442695
      %v672 = vpow.pop %v671
      %v673 = vmul.f32 %v651, 1.442695
      %v674 = vpow.pop %v673
      %v675 = vmul.f32 %v652, 1.442695
      %v676 = vpow.pop %v675
      %v677 = vmul.f32 %v653, 1.442695
      %v678 = vpow.pop %v677
      %v679 = vmul.f32 %v654, 1.442695
      %v680 = vpow.pop %v679
      %v681 = vmul.f32 %v655, 1.442695
      %v682 = vpow.pop %v681
      %v683 = vmul.f32 %v656, 1.442695
      %v684 = vpow.pop %v683
      %v685 = vmul.f32 %v657, 1.442695
      %v686 = vpow.pop %v685
      %v687 = vmul.f32 %v658, 1.442695
      %v688 = vpow.pop %v687
      %v689 = vmul.f32 %v659, 1.442695
      %v690 = vpow.pop %v689
      %v691 = vmul.f32 %v660, 1.442695
      %v692 = vpow.pop %v691
      %v693 = vadd.f32 %v662, 1.0
      %v694 = vadd.f32 %v664, 1.0
      %v695 = vadd.f32 %v666, 1.0
      %v696 = vadd.f32 %v668, 1.0
      %v697 = vadd.f32 %v670, 1.0
      %v698 = vadd.f32 %v672, 1.0
      %v699 = vadd.f32 %v674, 1.0
      %v700 = vadd.f32 %v676, 1.0
      %v701 = vadd.f32 %v678, 1.0
      %v702 = vadd.f32 %v680, 1.0
      %v703 = vadd.f32 %v682, 1.0
      %v704 = vadd.f32 %v684, 1.0
      %v705 = vadd.f32 %v686, 1.0
      %v706 = vadd.f32 %v688, 1.0
      %v707 = vadd.f32 %v690, 1.0
      %v708 = vadd.f32 %v692, 1.0
      %v709 = vrcp.pop %v693
      %v710 = vmul.f32 1.0, %v709
      %v711 = vrcp.pop %v694
      %v712 = vmul.f32 1.0, %v711
      %v713 = vrcp.pop %v695
      %v714 = vmul.f32 1.0, %v713
      %v715 = vrcp.pop %v696
      %v716 = vmul.f32 1.0, %v715
      %v717 = vrcp.pop %v697
      %v718 = vmul.f32 1.0, %v717
      %v719 = vrcp.pop %v698
      %v720 = vmul.f32 1.0, %v719
      %v721 = vrcp.pop %v699
      %v722 = vmul.f32 1.0, %v721
      %v723 = vrcp.pop %v700
      %v724 = vmul.f32 1.0, %v723
      %v725 = vrcp.pop %v701
      %v726 = vmul.f32 1.0, %v725
      %v727 = vrcp.pop %v702
      %v728 = vmul.f32 1.0, %v727
      %v729 = vrcp.pop %v703
      %v730 = vmul.f32 1.0, %v729
      %v731 = vrcp.pop %v704
      %v732 = vmul.f32 1.0, %v731
      %v733 = vrcp.pop %v705
      %v734 = vmul.f32 1.0, %v733
      %v735 = vrcp.pop %v706
      %v736 = vmul.f32 1.0, %v735
      %v737 = vrcp.pop %v707
      %v738 = vmul.f32 1.0, %v737
      %v739 = vrcp.pop %v708
      %v740 = vmul.f32 1.0, %v739
      %v741 = vmul.f32 %v599, %v710
      %v742 = vmul.f32 %v601, %v712
      %v743 = vmul.f32 %v605, %v714
      %v744 = vmul.f32 %v607, %v716
      %v745 = vmul.f32 %v611, %v718
      %v746 = vmul.f32 %v613, %v720
      %v747 = vmul.f32 %v617, %v722
      %v748 = vmul.f32 %v619, %v724
      %v749 = vmul.f32 %v623, %v726
      %v750 = vmul.f32 %v625, %v728
      %v751 = vmul.f32 %v629, %v730
      %v752 = vmul.f32 %v631, %v732
      %v753 = vmul.f32 %v635, %v734
      %v754 = vmul.f32 %v637, %v736
      %v755 = vmul.f32 %v641, %v738
      %v756 = vmul.f32 %v643, %v740
      %v757 = vld [vmem:[%s5] sm:$0xff]
      %v758 = vld [vmem:[%s5 + $0x8] sm:$0xff]
      %v759 = vld [vmem:[%s6] sm:$0xff]
      %v760 = vld [vmem:[%s6 + $0x8] sm:$0xff]
      %762 = vset.pattern.permute.xlu0 0
      %763 = vperm.xlu0 %762, %v759
      %v764 = vpop.permute.xlu0 %763
      %767 = vset.pattern.permute.xlu0 0
      %768 = vperm.xlu0 %767, %v760
      %v769 = vpop.permute.xlu0 %768
      %vm771 = vcmask 523264
      %v773 = vsel %vm771, %v757, 0
      %v776 = vsel %vm771, %v758, 0
      %778 = vmatprep.subr.mxu0 0.0
      %779 = vmatpush1.msra.mxu0 0.0
      %780 = vmatprep.subr.mxu0 0.0
      %781 = vmatpush1.msra.mxu0 0.0
      %782 = vmatprep.subr.mxu0 0.0
      %783 = vmatpush1.msra.mxu0 0.0
      %784 = vmatprep.subr.mxu0 0.0
      %785 = vmatpush1.msra.mxu0 0.0
      %786 = vmatprep.subr.mxu0 0.0
      %787 = vmatpush1.msra.mxu0 0.0
      %788 = vmatprep.subr.mxu0 0.0
      %789 = vmatpush1.msra.mxu0 0.0
      %790 = vmatprep.subr.mxu0 0.0
      %791 = vmatpush1.msra.mxu0 0.0
      %792 = vmatprep.subr.mxu0 0.0
      %793 = vmatpush1.msra.mxu0 0.0
      %794 = vmatprep.subr.mxu0 %v756
      %795 = vmatpush1.msra.mxu0 %v755
      %796 = vmatprep.subr.mxu0 %v754
      %797 = vmatpush1.msra.mxu0 %v753
      %798 = vmatprep.subr.mxu0 %v752
      %799 = vmatpush1.msra.mxu0 %v751
      %800 = vmatprep.subr.mxu0 %v750
      %801 = vmatpush1.msra.mxu0 %v749
      %802 = vmatprep.subr.mxu0 %v748
      %803 = vmatpush1.msra.mxu0 %v747
      %804 = vmatprep.subr.mxu0 %v746
      %805 = vmatpush1.msra.mxu0 %v745
      %806 = vmatprep.subr.mxu0 %v744
      %807 = vmatpush1.msra.mxu0 %v743
      %808 = vmatprep.subr.mxu0 %v742
      %809 = vmatpush1.msra.mxu0 %v741
      %810 = vmatprep.subr.mxu0 0.0
      %811 = vmatpush2.msra.mxu0 0.0
      %812 = vmatprep.subr.mxu0 0.0
      %813 = vmatpush2.msra.mxu0 0.0
      %814 = vmatprep.subr.mxu0 0.0
      %815 = vmatpush2.msra.mxu0 0.0
      %816 = vmatprep.subr.mxu0 0.0
      %817 = vmatpush2.msra.mxu0 0.0
      %818 = vmatprep.subr.mxu0 0.0
      %819 = vmatpush2.msra.mxu0 0.0
      %820 = vmatprep.subr.mxu0 0.0
      %821 = vmatpush2.msra.mxu0 0.0
      %822 = vmatprep.subr.mxu0 0.0
      %823 = vmatpush2.msra.mxu0 0.0
      %824 = vmatprep.subr.mxu0 0.0
      %825 = vmatpush2.msra.mxu0 0.0
      %826 = vmatprep.subr.mxu0 0.0
      %827 = vmatpush2.msra.mxu0 0.0
      %828 = vmatprep.subr.mxu0 0.0
      %829 = vmatpush2.msra.mxu0 0.0
      %830 = vmatprep.subr.mxu0 0.0
      %831 = vmatpush2.msra.mxu0 0.0
      %832 = vmatprep.subr.mxu0 0.0
      %833 = vmatpush2.msra.mxu0 0.0
      %834 = vmatprep.subr.mxu0 0.0
      %835 = vmatpush2.msra.mxu0 0.0
      %836 = vmatprep.subr.mxu0 0.0
      %837 = vmatpush2.msra.mxu0 0.0
      %838 = vmatprep.subr.mxu0 0.0
      %839 = vmatpush2.msra.mxu0 0.0
      %840 = vmatprep.subr.mxu0 0.0
      %841 = vmatpush2.msra.mxu0 0.0
      %842 = vmatprep.mubr.f32.mxu0 0.0
      %843 = vmatmul.mubr.f32.gmra.mxu0 %v773
      %v844 = vpop.f32.mrf.mxu0
      %v845 = vadd.f32 %v764, %v844
      %v846 = vpop.f32.mrf.mxu0
      %v847 = vadd.f32 %v764, %v846
      %848 = vmatprep.mubr.f32.mxu0 0.0
      %849 = vmatmul.mubr.f32.gmra.mxu0 %v776
      %v850 = vpop.f32.mrf.mxu0
      %v851 = vadd.f32 %v769, %v850
      %v852 = vpop.f32.mrf.mxu0
      %v853 = vadd.f32 %v769, %v852
      %854 = vdwg.mxu0
      %v855 = vlaneseq
      %v856 = vand.u32 %v855, 127
      %v857 = vadd.s32 %v856, 128
      %v858 = vand.u32 %v856, 15
      %v859 = vand.u32 %v857, 15
      %vm860 = vcmp.ge.s32.totalorder %v858, 1
      %vm861 = vcmp.ge.s32.totalorder %v859, 1
      %vm862 = vcmp.le.s32.totalorder %v858, 14
      %vm863 = vcmp.le.s32.totalorder %v859, 14
      %864 = vst [vmem:[#allocation2] sm:$0xff] 0.0
      %865 = vst [vmem:[#allocation2 + $0x8] sm:$0xff] 0.0
      %866 = vst [vmem:[#allocation2 + $0x10] sm:$0xff] 0.0
      %867 = vst [vmem:[#allocation2 + $0x18] sm:$0xff] 0.0
      %v868 = vld [vmem:[%s416] sm:$0xff]
      %v870 = vcombine.high %v868, %v868
      %872 = vst [vmem:[#allocation2 + $0x8] sm:$0xf] %v868
      %873 = vst [vmem:[#allocation2 + $0x10] sm:$0xf] %v870
      %v874 = vld [vmem:[%s421] sm:$0xff]
      %v876 = vcombine.low %v874, %v874
      %878 = vst [vmem:[#allocation2 + $0x8] sm:$0xf0] %v876
      %879 = vst [vmem:[#allocation2 + $0x10] sm:$0xf0] %v874
      %v880 = vld [vmem:[%s7] sm:$0xff]
      %v881 = vld [vmem:[%s7 + $0x8] sm:$0xff]
      %v882 = vld [vmem:[#allocation2] sm:$0xff]
      %v883 = vld [vmem:[#allocation2 + $0x8] sm:$0xff]
      %v884 = vld [vmem:[#allocation2 + $0x10] sm:$0xff]
      %v885 = vsel %vm860, 1, 0
      %v886 = vsel %vm861, 1, 0
      %vm887 = vcmp.eq.s32.totalorder %v885, 1
      %vm888 = vcmp.eq.s32.totalorder %v886, 1
      %892 = vrot.lane.b32.xlu0 %v882, 17
      %v893 = vpop.permute.xlu0 %892
      %894 = vrot.lane.b32.xlu0 %v883, 17
      %v895 = vpop.permute.xlu0 %894
      %896 = vrot.lane.b32.xlu0 %v884, 17
      %v897 = vpop.permute.xlu0 %896
      %vm898 = vcmask 138240
      %v899 = vsel %vm898, %v893, %v895
      %v900 = vsel %vm898, %v895, %v897
      %v903 = vsel %vm887, %v899, 0.0
      %v904 = vsel %vm888, %v900, 0.0
      %v905 = vsel %vm862, 1, 0
      %v906 = vsel %vm863, 1, 0
      %vm907 = vcmp.eq.s32.totalorder %v905, 1
      %vm908 = vcmp.eq.s32.totalorder %v906, 1
      %909 = vrot.lane.b32.xlu0 %v882, 15
      %v910 = vpop.permute.xlu0 %909
      %911 = vrot.lane.b32.xlu0 %v883, 15
      %v912 = vpop.permute.xlu0 %911
      %913 = vrot.lane.b32.xlu0 %v884, 15
      %v914 = vpop.permute.xlu0 %913
      %vm915 = vcmask 121856
      %v916 = vsel %vm915, %v910, %v912
      %v917 = vsel %vm915, %v912, %v914
      %v920 = vsel %vm907, %v916, 0.0
      %v921 = vsel %vm908, %v917, 0.0
      %922 = vrot.lane.b32.xlu0 %v882, 1
      %v923 = vpop.permute.xlu0 %922
      %924 = vrot.lane.b32.xlu0 %v883, 1
      %v925 = vpop.permute.xlu0 %924
      %926 = vrot.lane.b32.xlu0 %v884, 1
      %v927 = vpop.permute.xlu0 %926
      %vm928 = vcmask 7168
      %v929 = vsel %vm928, %v923, %v925
      %v930 = vsel %vm928, %v925, %v927
      %v933 = vsel %vm887, %v929, 0.0
      %v934 = vsel %vm888, %v930, 0.0
      %v935 = vld [vmem:[#allocation2 + $0x8] sm:$0xff]
      %v936 = vld [vmem:[#allocation2 + $0x10] sm:$0xff]
      %v937 = vld [vmem:[#allocation2 + $0x18] sm:$0xff]
      %941 = vrot.lane.b32.xlu0 %v935, 127
      %v942 = vpop.permute.xlu0 %941
      %943 = vrot.lane.b32.xlu0 %v936, 127
      %v944 = vpop.permute.xlu0 %943
      %945 = vrot.lane.b32.xlu0 %v937, 127
      %v946 = vpop.permute.xlu0 %945
      %vm947 = vcmask 1039360
      %v948 = vsel %vm947, %v942, %v944
      %v949 = vsel %vm947, %v944, %v946
      %v952 = vsel %vm907, %v948, 0.0
      %v953 = vsel %vm908, %v949, 0.0
      %954 = vrot.lane.b32.xlu0 %v935, 113
      %v955 = vpop.permute.xlu0 %954
      %956 = vrot.lane.b32.xlu0 %v936, 113
      %v957 = vpop.permute.xlu0 %956
      %958 = vrot.lane.b32.xlu0 %v937, 113
      %v959 = vpop.permute.xlu0 %958
      %vm960 = vcmask 924672
      %v961 = vsel %vm960, %v955, %v957
      %v962 = vsel %vm960, %v957, %v959
      %v965 = vsel %vm887, %v961, 0.0
      %v966 = vsel %vm888, %v962, 0.0
      %967 = vrot.lane.b32.xlu0 %v935, 111
      %v968 = vpop.permute.xlu0 %967
      %969 = vrot.lane.b32.xlu0 %v936, 111
      %v970 = vpop.permute.xlu0 %969
      %971 = vrot.lane.b32.xlu0 %v937, 111
      %v972 = vpop.permute.xlu0 %971
      %vm973 = vcmask 908288
      %v974 = vsel %vm973, %v968, %v970
      %v975 = vsel %vm973, %v970, %v972
      %v978 = vsel %vm907, %v974, 0.0
      %v979 = vsel %vm908, %v975, 0.0
      %980 = vrot.lane.b32.xlu0 %v882, 16
      %v981 = vpop.permute.xlu0 %980
      %982 = vrot.lane.b32.xlu0 %v883, 16
      %v983 = vpop.permute.xlu0 %982
      %984 = vrot.lane.b32.xlu0 %v884, 16
      %v985 = vpop.permute.xlu0 %984
      %vm986 = vcmask 130048
      %v987 = vsel %vm986, %v981, %v983
      %v988 = vsel %vm986, %v983, %v985
      %991 = vrot.lane.b32.xlu0 %v935, 112
      %v992 = vpop.permute.xlu0 %991
      %993 = vrot.lane.b32.xlu0 %v936, 112
      %v994 = vpop.permute.xlu0 %993
      %995 = vrot.lane.b32.xlu0 %v937, 112
      %v996 = vpop.permute.xlu0 %995
      %vm997 = vcmask 916480
      %v998 = vsel %vm997, %v992, %v994
      %v999 = vsel %vm997, %v994, %v996
      %v1002 = vld [vmem:[%s8] sm:$0xff]
      %v1003 = vld [vmem:[%s8 + $0x8] sm:$0xff]
      %1005 = vset.pattern.permute.xlu0 0
      %1006 = vperm.xlu0 %1005, %v1002
      %v1007 = vpop.permute.xlu0 %1006
      %1010 = vset.pattern.permute.xlu0 0
      %1011 = vperm.xlu0 %1010, %v1003
      %v1012 = vpop.permute.xlu0 %1011
      %vm1014 = vcmask 588800
      %v1016 = vsel %vm1014, %v880, 0
      %v1019 = vsel %vm1014, %v881, 0
      %1021 = vmatprep.subr.mxu0 0.0
      %1022 = vmatpush1.msra.mxu0 0.0
      %1023 = vmatprep.subr.mxu0 0.0
      %1024 = vmatpush1.msra.mxu0 0.0
      %1025 = vmatprep.subr.mxu0 0.0
      %1026 = vmatpush1.msra.mxu0 0.0
      %1027 = vmatprep.subr.mxu0 0.0
      %1028 = vmatpush1.msra.mxu0 0.0
      %1029 = vmatprep.subr.mxu0 0.0
      %1030 = vmatpush1.msra.mxu0 0.0
      %1031 = vmatprep.subr.mxu0 0.0
      %1032 = vmatpush1.msra.mxu0 0.0
      %1033 = vmatprep.subr.mxu0 0.0
      %1034 = vmatpush1.msra.mxu0 0.0
      %1035 = vmatprep.subr.mxu0 %v979
      %1036 = vmatpush1.msra.mxu0 %v978
      %1037 = vmatprep.subr.mxu0 %v999
      %1038 = vmatpush1.msra.mxu0 %v998
      %1039 = vmatprep.subr.mxu0 %v966
      %1040 = vmatpush1.msra.mxu0 %v965
      %1041 = vmatprep.subr.mxu0 %v953
      %1042 = vmatpush1.msra.mxu0 %v952
      %1043 = vmatprep.subr.mxu0 %v884
      %1044 = vmatpush1.msra.mxu0 %v883
      %1045 = vmatprep.subr.mxu0 %v934
      %1046 = vmatpush1.msra.mxu0 %v933
      %1047 = vmatprep.subr.mxu0 %v921
      %1048 = vmatpush1.msra.mxu0 %v920
      %1049 = vmatprep.subr.mxu0 %v988
      %1050 = vmatpush1.msra.mxu0 %v987
      %1051 = vmatprep.subr.mxu0 %v904
      %1052 = vmatpush1.msra.mxu0 %v903
      %1053 = vmatprep.subr.mxu0 0.0
      %1054 = vmatpush2.msra.mxu0 0.0
      %1055 = vmatprep.subr.mxu0 0.0
      %1056 = vmatpush2.msra.mxu0 0.0
      %1057 = vmatprep.subr.mxu0 0.0
      %1058 = vmatpush2.msra.mxu0 0.0
      %1059 = vmatprep.subr.mxu0 0.0
      %1060 = vmatpush2.msra.mxu0 0.0
      %1061 = vmatprep.subr.mxu0 0.0
      %1062 = vmatpush2.msra.mxu0 0.0
      %1063 = vmatprep.subr.mxu0 0.0
      %1064 = vmatpush2.msra.mxu0 0.0
      %1065 = vmatprep.subr.mxu0 0.0
      %1066 = vmatpush2.msra.mxu0 0.0
      %1067 = vmatprep.subr.mxu0 0.0
      %1068 = vmatpush2.msra.mxu0 0.0
      %1069 = vmatprep.subr.mxu0 0.0
      %1070 = vmatpush2.msra.mxu0 0.0
      %1071 = vmatprep.subr.mxu0 0.0
      %1072 = vmatpush2.msra.mxu0 0.0
      %1073 = vmatprep.subr.mxu0 0.0
      %1074 = vmatpush2.msra.mxu0 0.0
      %1075 = vmatprep.subr.mxu0 0.0
      %1076 = vmatpush2.msra.mxu0 0.0
      %1077 = vmatprep.subr.mxu0 0.0
      %1078 = vmatpush2.msra.mxu0 0.0
      %1079 = vmatprep.subr.mxu0 0.0
      %1080 = vmatpush2.msra.mxu0 0.0
      %1081 = vmatprep.subr.mxu0 0.0
      %1082 = vmatpush2.msra.mxu0 0.0
      %1083 = vmatprep.subr.mxu0 0.0
      %1084 = vmatpush2.msra.mxu0 0.0
      %1085 = vmatprep.mubr.f32.mxu0 0.0
      %1086 = vmatmul.mubr.f32.gmra.mxu0 %v1016
      %v1087 = vpop.f32.mrf.mxu0
      %v1088 = vadd.f32 %v1007, %v1087
      %v1089 = vpop.f32.mrf.mxu0
      %v1090 = vadd.f32 %v1007, %v1089
      %1091 = vmatprep.mubr.f32.mxu0 0.0
      %1092 = vmatmul.mubr.f32.gmra.mxu0 %v1019
      %v1093 = vpop.f32.mrf.mxu0
      %v1094 = vadd.f32 %v1012, %v1093
      %v1095 = vpop.f32.mrf.mxu0
      %v1096 = vadd.f32 %v1012, %v1095
      %1097 = vdwg.mxu0
      %v1098 = vadd.f32 %v1088, %v845
      %v1099 = vadd.f32 %v1090, %v847
      %v1100 = vadd.f32 %v1094, %v851
      %v1101 = vadd.f32 %v1096, %v853
      %v1102 = vxor.u32 %v1098, 2147483648
      %v1103 = vxor.u32 %v1099, 2147483648
      %v1104 = vxor.u32 %v1100, 2147483648
      %v1105 = vxor.u32 %v1101, 2147483648
      %v1106 = vmul.f32 %v1102, 1.442695
      %v1107 = vpow.pop %v1106
      %v1108 = vmul.f32 %v1103, 1.442695
      %v1109 = vpow.pop %v1108
      %v1110 = vmul.f32 %v1104, 1.442695
      %v1111 = vpow.pop %v1110
      %v1112 = vmul.f32 %v1105, 1.442695
      %v1113 = vpow.pop %v1112
      %v1114 = vadd.f32 %v1107, 1.0
      %v1115 = vadd.f32 %v1109, 1.0
      %v1116 = vadd.f32 %v1111, 1.0
      %v1117 = vadd.f32 %v1113, 1.0
      %v1118 = vrcp.pop %v1114
      %v1119 = vmul.f32 1.0, %v1118
      %v1120 = vrcp.pop %v1115
      %v1121 = vmul.f32 1.0, %v1120
      %v1122 = vrcp.pop %v1116
      %v1123 = vmul.f32 1.0, %v1122
      %v1124 = vrcp.pop %v1117
      %v1125 = vmul.f32 1.0, %v1124
      %v1126 = vmul.f32 %v1098, %v1119
      %v1127 = vmul.f32 %v1099, %v1121
      %v1128 = vmul.f32 %v1100, %v1123
      %v1129 = vmul.f32 %v1101, %v1125
      %1130 = vst [vmem:[#allocation3] sm:$0xff] 0.0
      %1131 = vst [vmem:[#allocation3 + $0x8] sm:$0xff] 0.0
      %1132 = vst [vmem:[#allocation3 + $0x10] sm:$0xff] 0.0
      %1133 = vst [vmem:[#allocation3 + $0x18] sm:$0xff] 0.0
      %1134 = vst [vmem:[#allocation3 + $0x20] sm:$0xff] 0.0
      %1135 = vst [vmem:[#allocation3 + $0x28] sm:$0xff] 0.0
      %1136 = vst [vmem:[#allocation3 + $0x30] sm:$0xff] 0.0
      %1137 = vst [vmem:[#allocation3 + $0x38] sm:$0xff] 0.0
      %1138 = vst [vmem:[#allocation3 + $0x8] sm:$0xff] %v1126
      %1139 = vst [vmem:[#allocation3 + $0x10] sm:$0xff] %v1127
      %1140 = vst [vmem:[#allocation3 + $0x28] sm:$0xff] %v1128
      %1141 = vst [vmem:[#allocation3 + $0x30] sm:$0xff] %v1129
      %v1142 = vld [vmem:[%s9] sm:$0xff]
      %v1143 = vld [vmem:[#allocation3] sm:$0xff]
      %v1144 = vld [vmem:[#allocation3 + $0x8] sm:$0xff]
      %v1145 = vld [vmem:[#allocation3 + $0x10] sm:$0xff]
      %v1146 = vld [vmem:[#allocation3 + $0x20] sm:$0xff]
      %v1147 = vld [vmem:[#allocation3 + $0x28] sm:$0xff]
      %v1148 = vld [vmem:[#allocation3 + $0x30] sm:$0xff]
      %1155 = vrot.lane.b32.xlu0 %v1143, 17
      %v1156 = vpop.permute.xlu0 %1155
      %1157 = vrot.lane.b32.xlu0 %v1144, 17
      %v1158 = vpop.permute.xlu0 %1157
      %1159 = vrot.lane.b32.xlu0 %v1145, 17
      %v1160 = vpop.permute.xlu0 %1159
      %1161 = vrot.lane.b32.xlu0 %v1146, 17
      %v1162 = vpop.permute.xlu0 %1161
      %1163 = vrot.lane.b32.xlu0 %v1147, 17
      %v1164 = vpop.permute.xlu0 %1163
      %1165 = vrot.lane.b32.xlu0 %v1148, 17
      %v1166 = vpop.permute.xlu0 %1165
      %v1167 = vsel %vm898, %v1156, %v1158
      %v1168 = vsel %vm898, %v1158, %v1160
      %v1169 = vsel %vm898, %v1162, %v1164
      %v1170 = vsel %vm898, %v1164, %v1166
      %v1175 = vsel %vm887, %v1167, 0.0
      %v1176 = vsel %vm888, %v1168, 0.0
      %v1177 = vsel %vm887, %v1169, 0.0
      %v1178 = vsel %vm888, %v1170, 0.0
      %1179 = vrot.lane.b32.xlu0 %v1143, 15
      %v1180 = vpop.permute.xlu0 %1179
      %1181 = vrot.lane.b32.xlu0 %v1144, 15
      %v1182 = vpop.permute.xlu0 %1181
      %1183 = vrot.lane.b32.xlu0 %v1145, 15
      %v1184 = vpop.permute.xlu0 %1183
      %1185 = vrot.lane.b32.xlu0 %v1146, 15
      %v1186 = vpop.permute.xlu0 %1185
      %1187 = vrot.lane.b32.xlu0 %v1147, 15
      %v1188 = vpop.permute.xlu0 %1187
      %1189 = vrot.lane.b32.xlu0 %v1148, 15
      %v1190 = vpop.permute.xlu0 %1189
      %v1191 = vsel %vm915, %v1180, %v1182
      %v1192 = vsel %vm915, %v1182, %v1184
      %v1193 = vsel %vm915, %v1186, %v1188
      %v1194 = vsel %vm915, %v1188, %v1190
      %v1199 = vsel %vm907, %v1191, 0.0
      %v1200 = vsel %vm908, %v1192, 0.0
      %v1201 = vsel %vm907, %v1193, 0.0
      %v1202 = vsel %vm908, %v1194, 0.0
      %1203 = vrot.lane.b32.xlu0 %v1143, 1
      %v1204 = vpop.permute.xlu0 %1203
      %1205 = vrot.lane.b32.xlu0 %v1144, 1
      %v1206 = vpop.permute.xlu0 %1205
      %1207 = vrot.lane.b32.xlu0 %v1145, 1
      %v1208 = vpop.permute.xlu0 %1207
      %1209 = vrot.lane.b32.xlu0 %v1146, 1
      %v1210 = vpop.permute.xlu0 %1209
      %1211 = vrot.lane.b32.xlu0 %v1147, 1
      %v1212 = vpop.permute.xlu0 %1211
      %1213 = vrot.lane.b32.xlu0 %v1148, 1
      %v1214 = vpop.permute.xlu0 %1213
      %v1215 = vsel %vm928, %v1204, %v1206
      %v1216 = vsel %vm928, %v1206, %v1208
      %v1217 = vsel %vm928, %v1210, %v1212
      %v1218 = vsel %vm928, %v1212, %v1214
      %v1223 = vsel %vm887, %v1215, 0.0
      %v1224 = vsel %vm888, %v1216, 0.0
      %v1225 = vsel %vm887, %v1217, 0.0
      %v1226 = vsel %vm888, %v1218, 0.0
      %v1227 = vld [vmem:[#allocation3 + $0x8] sm:$0xff]
      %v1228 = vld [vmem:[#allocation3 + $0x10] sm:$0xff]
      %v1229 = vld [vmem:[#allocation3 + $0x18] sm:$0xff]
      %v1230 = vld [vmem:[#allocation3 + $0x28] sm:$0xff]
      %v1231 = vld [vmem:[#allocation3 + $0x30] sm:$0xff]
      %v1232 = vld [vmem:[#allocation3 + $0x38] sm:$0xff]
      %1239 = vrot.lane.b32.xlu0 %v1227, 127
      %v1240 = vpop.permute.xlu0 %1239
      %1241 = vrot.lane.b32.xlu0 %v1228, 127
      %v1242 = vpop.permute.xlu0 %1241
      %1243 = vrot.lane.b32.xlu0 %v1229, 127
      %v1244 = vpop.permute.xlu0 %1243
      %1245 = vrot.lane.b32.xlu0 %v1230, 127
      %v1246 = vpop.permute.xlu0 %1245
      %1247 = vrot.lane.b32.xlu0 %v1231, 127
      %v1248 = vpop.permute.xlu0 %1247
      %1249 = vrot.lane.b32.xlu0 %v1232, 127
      %v1250 = vpop.permute.xlu0 %1249
      %v1251 = vsel %vm947, %v1240, %v1242
      %v1252 = vsel %vm947, %v1242, %v1244
      %v1253 = vsel %vm947, %v1246, %v1248
      %v1254 = vsel %vm947, %v1248, %v1250
      %v1259 = vsel %vm907, %v1251, 0.0
      %v1260 = vsel %vm908, %v1252, 0.0
      %v1261 = vsel %vm907, %v1253, 0.0
      %v1262 = vsel %vm908, %v1254, 0.0
      %1263 = vrot.lane.b32.xlu0 %v1227, 113
      %v1264 = vpop.permute.xlu0 %1263
      %1265 = vrot.lane.b32.xlu0 %v1228, 113
      %v1266 = vpop.permute.xlu0 %1265
      %1267 = vrot.lane.b32.xlu0 %v1229, 113
      %v1268 = vpop.permute.xlu0 %1267
      %1269 = vrot.lane.b32.xlu0 %v1230, 113
      %v1270 = vpop.permute.xlu0 %1269
      %1271 = vrot.lane.b32.xlu0 %v1231, 113
      %v1272 = vpop.permute.xlu0 %1271
      %1273 = vrot.lane.b32.xlu0 %v1232, 113
      %v1274 = vpop.permute.xlu0 %1273
      %v1275 = vsel %vm960, %v1264, %v1266
      %v1276 = vsel %vm960, %v1266, %v1268
      %v1277 = vsel %vm960, %v1270, %v1272
      %v1278 = vsel %vm960, %v1272, %v1274
      %v1283 = vsel %vm887, %v1275, 0.0
      %v1284 = vsel %vm888, %v1276, 0.0
      %v1285 = vsel %vm887, %v1277, 0.0
      %v1286 = vsel %vm888, %v1278, 0.0
      %1287 = vrot.lane.b32.xlu0 %v1227, 111
      %v1288 = vpop.permute.xlu0 %1287
      %1289 = vrot.lane.b32.xlu0 %v1228, 111
      %v1290 = vpop.permute.xlu0 %1289
      %1291 = vrot.lane.b32.xlu0 %v1229, 111
      %v1292 = vpop.permute.xlu0 %1291
      %1293 = vrot.lane.b32.xlu0 %v1230, 111
      %v1294 = vpop.permute.xlu0 %1293
      %1295 = vrot.lane.b32.xlu0 %v1231, 111
      %v1296 = vpop.permute.xlu0 %1295
      %1297 = vrot.lane.b32.xlu0 %v1232, 111
      %v1298 = vpop.permute.xlu0 %1297
      %v1299 = vsel %vm973, %v1288, %v1290
      %v1300 = vsel %vm973, %v1290, %v1292
      %v1301 = vsel %vm973, %v1294, %v1296
      %v1302 = vsel %vm973, %v1296, %v1298
      %v1307 = vsel %vm907, %v1299, 0.0
      %v1308 = vsel %vm908, %v1300, 0.0
      %v1309 = vsel %vm907, %v1301, 0.0
      %v1310 = vsel %vm908, %v1302, 0.0
      %1311 = vrot.lane.b32.xlu0 %v1143, 16
      %v1312 = vpop.permute.xlu0 %1311
      %1313 = vrot.lane.b32.xlu0 %v1144, 16
      %v1314 = vpop.permute.xlu0 %1313
      %1315 = vrot.lane.b32.xlu0 %v1145, 16
      %v1316 = vpop.permute.xlu0 %1315
      %1317 = vrot.lane.b32.xlu0 %v1146, 16
      %v1318 = vpop.permute.xlu0 %1317
      %1319 = vrot.lane.b32.xlu0 %v1147, 16
      %v1320 = vpop.permute.xlu0 %1319
      %1321 = vrot.lane.b32.xlu0 %v1148, 16
      %v1322 = vpop.permute.xlu0 %1321
      %v1323 = vsel %vm986, %v1312, %v1314
      %v1324 = vsel %vm986, %v1314, %v1316
      %v1325 = vsel %vm986, %v1318, %v1320
      %v1326 = vsel %vm986, %v1320, %v1322
      %1331 = vrot.lane.b32.xlu0 %v1227, 112
      %v1332 = vpop.permute.xlu0 %1331
      %1333 = vrot.lane.b32.xlu0 %v1228, 112
      %v1334 = vpop.permute.xlu0 %1333
      %1335 = vrot.lane.b32.xlu0 %v1229, 112
      %v1336 = vpop.permute.xlu0 %1335
      %1337 = vrot.lane.b32.xlu0 %v1230, 112
      %v1338 = vpop.permute.xlu0 %1337
      %1339 = vrot.lane.b32.xlu0 %v1231, 112
      %v1340 = vpop.permute.xlu0 %1339
      %1341 = vrot.lane.b32.xlu0 %v1232, 112
      %v1342 = vpop.permute.xlu0 %1341
      %v1343 = vsel %vm997, %v1332, %v1334
      %v1344 = vsel %vm997, %v1334, %v1336
      %v1345 = vsel %vm997, %v1338, %v1340
      %v1346 = vsel %vm997, %v1340, %v1342
      %v1351 = vld [vmem:[%s10] sm:$0xf]
      %1353 = vset.pattern.permute.xlu0 0
      %1354 = vperm.xlu0 %1353, %v1351
      %v1355 = vpop.permute.xlu0 %1354
      %v1358 = vcombine.high %v1142, %v1142
      %v1359 = vsel %vm986, %v1358, 0
      %1361 = vmatprep.subr.mxu0 %v1346
      %1362 = vmatpush1.msra.mxu0 %v1345
      %1363 = vmatprep.subr.mxu0 %v1344
      %1364 = vmatpush1.msra.mxu0 %v1343
      %1365 = vmatprep.subr.mxu0 %v1286
      %1366 = vmatpush1.msra.mxu0 %v1285
      %1367 = vmatprep.subr.mxu0 %v1284
      %1368 = vmatpush1.msra.mxu0 %v1283
      %1369 = vmatprep.subr.mxu0 %v1262
      %1370 = vmatpush1.msra.mxu0 %v1261
      %1371 = vmatprep.subr.mxu0 %v1260
      %1372 = vmatpush1.msra.mxu0 %v1259
      %1373 = vmatprep.subr.mxu0 %v1148
      %1374 = vmatpush1.msra.mxu0 %v1147
      %1375 = vmatprep.subr.mxu0 %v1145
      %1376 = vmatpush1.msra.mxu0 %v1144
      %1377 = vmatprep.subr.mxu0 %v1226
      %1378 = vmatpush1.msra.mxu0 %v1225
      %1379 = vmatprep.subr.mxu0 %v1224
      %1380 = vmatpush1.msra.mxu0 %v1223
      %1381 = vmatprep.subr.mxu0 %v1202
      %1382 = vmatpush1.msra.mxu0 %v1201
      %1383 = vmatprep.subr.mxu0 %v1200
      %1384 = vmatpush1.msra.mxu0 %v1199
      %1385 = vmatprep.subr.mxu0 %v1326
      %1386 = vmatpush1.msra.mxu0 %v1325
      %1387 = vmatprep.subr.mxu0 %v1324
      %1388 = vmatpush1.msra.mxu0 %v1323
      %1389 = vmatprep.subr.mxu0 %v1178
      %1390 = vmatpush1.msra.mxu0 %v1177
      %1391 = vmatprep.subr.mxu0 %v1176
      %1392 = vmatpush1.msra.mxu0 %v1175
      %1393 = vmatprep.subr.mxu0 0.0
      %1394 = vmatpush2.msra.mxu0 0.0
      %1395 = vmatprep.subr.mxu0 0.0
      %1396 = vmatpush2.msra.mxu0 0.0
      %1397 = vmatprep.subr.mxu0 0.0
      %1398 = vmatpush2.msra.mxu0 0.0
      %1399 = vmatprep.subr.mxu0 0.0
      %1400 = vmatpush2.msra.mxu0 0.0
      %1401 = vmatprep.subr.mxu0 0.0
      %1402 = vmatpush2.msra.mxu0 0.0
      %1403 = vmatprep.subr.mxu0 0.0
      %1404 = vmatpush2.msra.mxu0 0.0
      %1405 = vmatprep.subr.mxu0 0.0
      %1406 = vmatpush2.msra.mxu0 0.0
      %1407 = vmatprep.subr.mxu0 0.0
      %1408 = vmatpush2.msra.mxu0 0.0
      %1409 = vmatprep.subr.mxu0 0.0
      %1410 = vmatpush2.msra.mxu0 0.0
      %1411 = vmatprep.subr.mxu0 0.0
      %1412 = vmatpush2.msra.mxu0 0.0
      %1413 = vmatprep.subr.mxu0 0.0
      %1414 = vmatpush2.msra.mxu0 0.0
      %1415 = vmatprep.subr.mxu0 0.0
      %1416 = vmatpush2.msra.mxu0 0.0
      %1417 = vmatprep.subr.mxu0 0.0
      %1418 = vmatpush2.msra.mxu0 0.0
      %1419 = vmatprep.subr.mxu0 0.0
      %1420 = vmatpush2.msra.mxu0 0.0
      %1421 = vmatprep.subr.mxu0 %v1310
      %1422 = vmatpush2.msra.mxu0 %v1309
      %1423 = vmatprep.subr.mxu0 %v1308
      %1424 = vmatpush2.msra.mxu0 %v1307
      %1425 = vmatprep.mubr.f32.mxu0 %v1359
      %1426 = vmatmul.mubr.f32.gmra.mxu0 %v1142
      %v1427 = vpop.f32.mrf.mxu0
      %v1428 = vadd.f32 %v1355, %v1427
      %v1429 = vpop.f32.mrf.mxu0
      %v1430 = vadd.f32 %v1355, %v1429
      %1431 = vdwg.mxu0
      %v1434 = vcombine.low %v1428, %v1430
      %1436 = vst [vmem:[%s426] sm:$0xff] %v1434
      %p1437 = scmp.lt.s32.totalorder %s22, 1
      %s1438 = scalar_select %p1437, %s22, 1
      %s1439 = smul.addr %s1438, 2
      %s1440 = smul.addr %s1439, 4
      %s1441 = scalar_lea.vmem %s11, %s1440
      // Predicated region
      $region65: #{diffusion_i2sb_forward.1} parent=63 // pred_check
        %p1442 = pneg %p286
      $region66: #{diffusion_i2sb_forward.1} parent=63 // pred_check_branch
        %1444 = sbr.rel (%p1442) target = $region68
      $region67: #{diffusion_i2sb_forward.1} parent=63 // pred_region
        _
      $region68: #{diffusion_i2sb_forward.1} parent=63 // pred_fallthru
        _
    $region64: #{diffusion_i2sb_forward.1} parent=5 // pred_fallthru
      _
    %p1445 = scmp.le.s32.totalorder 2, %s17
    // Predicated region
    $region69: #{diffusion_i2sb_forward.1} parent=5 // pred_check
      %p1446 = pneg %p1445
    $region70: #{diffusion_i2sb_forward.1} parent=5 // pred_check_branch
      %1448 = sbr.rel (%p1446) target = $region72
    $region71: #{diffusion_i2sb_forward.1} parent=5 // pred_region
      %s1449 = ssub.s32 %s17, 2
      // Predicated region
      $region73: #{diffusion_i2sb_forward.1} parent=71 // pred_check
        %p1450 = pneg %p292
      $region74: #{diffusion_i2sb_forward.1} parent=71 // pred_check_branch
        %1452 = sbr.rel (%p1450) target = $region76
      $region75: #{diffusion_i2sb_forward.1} parent=71 // pred_region
        %p1453 = scmp.lt.s32.totalorder %s23, 1
        %s1454 = scalar_select %p1453, %s23, 1
        %s1455 = smul.addr %s1454, 2
        %s1456 = smul.addr %s1455, 4
        %s1457 = scalar_lea.vmem %s11, %s1456
      $region76: #{diffusion_i2sb_forward.1} parent=71 // pred_fallthru
        _
    $region72: #{diffusion_i2sb_forward.1} parent=5 // pred_fallthru
      _
  $region6: #{diffusion_i2sb_forward.1} parent=0 // loop_footer
    %s21 = sadd.s32 1, %s17
  $region7: #{diffusion_i2sb_forward.1} parent=0 // loop_footer_branch
    %16 = sbr.rel target = $region3
  $region8: #{diffusion_i2sb_forward.1} parent=0 // loop_exit
    _

</llo_original>
